<compile_context>
chip_gen: v7x
topology: tpu7x:2x2x1
jax: 0.10.0
libtpu: 0.0.40
codegen_flags: <defaults>
</compile_context>

<pallas_src>
import jax
import jax.numpy as jnp
from jax.experimental import pallas as pl
from jax.experimental.pallas import tpu as pltpu

LANE = 128  # vreg lane width; pad all feature dims to a multiple of this


def _round_up(n, m):
    return ((n + m - 1) // m) * m


def _pad2d(a, rows, cols):
    r, c = a.shape
    return jnp.pad(a, ((0, rows - r), (0, cols - c)))


# ----------------------------------------------------------------------------
# Fused kernel: 4 x (matmul + bias + ReLU)  ->  matmul + bias + tanh
# ----------------------------------------------------------------------------
def _weightgen_kernel(x_ref,
                      w1_ref, b1_ref, w2_ref, b2_ref, w3_ref, b3_ref,
                      w4_ref, b4_ref, wo_ref, bo_ref,
                      o_ref):
    # bf16 operands into the MXU, f32 accumulation, f32 elementwise (v5e-safe).
    h = x_ref[...]                                              # bf16 [TB, 128]
    for w_ref, b_ref in ((w1_ref, b1_ref), (w2_ref, b2_ref),
                         (w3_ref, b3_ref), (w4_ref, b4_ref)):   # unrolled at trace time
        a = jnp.dot(h, w_ref[...], preferred_element_type=jnp.float32)  # MXU
        a = jnp.maximum(a + b_ref[...], 0.0)                    # f32 bias + ReLU (VPU)
        h = a.astype(x_ref.dtype)                               # back to bf16 for next MXU op
    y = jnp.dot(h, wo_ref[...], preferred_element_type=jnp.float32)     # MXU
    y = jnp.tanh(y + bo_ref[...])                               # f32 tanh (EUP)
    o_ref[...] = y.astype(o_ref.dtype)                          # lane-dense 128-wide store


# ----------------------------------------------------------------------------
# Wrapper: padding, batch grid, single pallas_call
# ----------------------------------------------------------------------------
def weight_generator_forward(x, params, *, tb=128, matmul_dtype=jnp.bfloat16):
    """Forward pass of WeightGenerator as one batched Pallas kernel."""
    (w1, b1), (w2, b2), (w3, b3), (w4, b4), (wo, bo) = params
    B, din = x.shape
    hid = w1.shape[1]
    dout = wo.shape[1]

    dp = _round_up(din, LANE)     # padded input width
    hp = _round_up(hid, LANE)     # padded hidden width
    op = _round_up(dout, LANE)    # padded output width (lane-dense stores)
    Bp = _round_up(B, tb)         # padded batch (multiple of the batch tile)

    # Matmul operands -> bf16 (halved HBM traffic, bf16 MXU); biases stay f32.
    xp = _pad2d(x, Bp, dp).astype(matmul_dtype)
    w1p = _pad2d(w1, dp, hp).astype(matmul_dtype)
    w2p = _pad2d(w2, hp, hp).astype(matmul_dtype)
    w3p = _pad2d(w3, hp, hp).astype(matmul_dtype)
    w4p = _pad2d(w4, hp, hp).astype(matmul_dtype)
    wop = _pad2d(wo, hp, op).astype(matmul_dtype)
    b1p = _pad2d(b1, 1, hp).astype(jnp.float32)
    b2p = _pad2d(b2, 1, hp).astype(jnp.float32)
    b3p = _pad2d(b3, 1, hp).astype(jnp.float32)
    b4p = _pad2d(b4, 1, hp).astype(jnp.float32)
    bop = _pad2d(bo, 1, op).astype(jnp.float32)

    grid = (Bp // tb,)
    batch_spec = lambda cols: pl.BlockSpec((tb, cols), lambda i: (i, 0))
    const_spec = lambda rows, cols: pl.BlockSpec((rows, cols), lambda i: (0, 0))

    yp = pl.pallas_call(
        _weightgen_kernel,
        out_shape=jax.ShapeDtypeStruct((Bp, op), jnp.float32),
        grid=grid,
        in_specs=[
            batch_spec(dp),                         # x: pipelined over the batch
            const_spec(dp, hp), const_spec(1, hp),  # fc1 (VMEM-resident)
            const_spec(hp, hp), const_spec(1, hp),  # fc2
            const_spec(hp, hp), const_spec(1, hp),  # fc3
            const_spec(hp, hp), const_spec(1, hp),  # fc4
            const_spec(hp, op), const_spec(1, op),  # fc_out
        ],
        out_specs=batch_spec(op),
        compiler_params=pltpu.CompilerParams(
            dimension_semantics=("parallel",)),     # v7x: shard batch over 2 TCs
    )(xp, w1p, b1p, w2p, b2p, w3p, b3p, w4p, b4p, wop, bop)

    return yp[:B, :dout]


# ----------------------------------------------------------------------------
# JAX mirror of the PyTorch WeightGenerator module
# ----------------------------------------------------------------------------
class WeightGenerator:
    """fc1..fc4 (hidden) + fc_out(5), forward = relu x4 -> linear -> tanh."""

    def __init__(self, input_size, hidden_size=64, *, key):
        ks = jax.random.split(key, 10)

        def linear(kw, kb, fan_in, fan_out):
            bound = fan_in ** -0.5  # PyTorch nn.Linear default init range
            w = jax.random.uniform(kw, (fan_in, fan_out), jnp.float32, -bound, bound)
            b = jax.random.uniform(kb, (1, fan_out), jnp.float32, -bound, bound)
            return w, b

        self.params = [
            linear(ks[0], ks[1], input_size, hidden_size),   # fc1
            linear(ks[2], ks[3], hidden_size, hidden_size),  # fc2
            linear(ks[4], ks[5], hidden_size, hidden_size),  # fc3
            linear(ks[6], ks[7], hidden_size, hidden_size),  # fc4
            linear(ks[8], ks[9], hidden_size, 5),            # fc_out
        ]

    def forward(self, x):
        return weight_generator_forward(x, self.params)

    __call__ = forward


def _reference_forward(x, params):
    """Pure-JAX f32 reference of the PyTorch forward."""
    h = x
    for i, (w, b) in enumerate(params):
        h = h @ w + b
        if i < len(params) - 1:
            h = jnp.maximum(h, 0.0)
    return jnp.tanh(h)


# ----------------------------------------------------------------------------
# Smoke test
# ----------------------------------------------------------------------------
if __name__ == "__main__":
    key = jax.random.PRNGKey(0)
    k_model, k_x = jax.random.split(key)

    batch, input_size, hidden_size = 256, 24, 64  # NumerAI-style tabular shapes

    model = WeightGenerator(input_size, hidden_size, key=k_model)
    x = jax.random.normal(k_x, (batch, input_size), dtype=jnp.float32)

    out = model(x)
    out = jax.block_until_ready(out)

    ref = _reference_forward(x, model.params)
    assert out.shape == (batch, 5)
    # bf16 matmul operands (f32 accumulation) -> small rounding vs f32 reference.
    assert jnp.allclose(out, ref, atol=3e-2, rtol=3e-2)

    print("KERNEL_OK")
</pallas_src>

<mosaic_0001>
module attributes {stable_mosaic.version = 11 : i64} {
  func.func @_weightgen_kernel(%arg0: i32, %arg1: memref<128x128xbf16, #tpu.memory_space<vmem>>, %arg2: memref<128x128xbf16, #tpu.memory_space<vmem>>, %arg3: memref<1x128xf32, #tpu.memory_space<vmem>>, %arg4: memref<128x128xbf16, #tpu.memory_space<vmem>>, %arg5: memref<1x128xf32, #tpu.memory_space<vmem>>, %arg6: memref<128x128xbf16, #tpu.memory_space<vmem>>, %arg7: memref<1x128xf32, #tpu.memory_space<vmem>>, %arg8: memref<128x128xbf16, #tpu.memory_space<vmem>>, %arg9: memref<1x128xf32, #tpu.memory_space<vmem>>, %arg10: memref<128x128xbf16, #tpu.memory_space<vmem>>, %arg11: memref<1x128xf32, #tpu.memory_space<vmem>>, %arg12: memref<128x128xf32, #tpu.memory_space<vmem>>) attributes {dimension_semantics = [#tpu.dimension_semantics<parallel>], iteration_bounds = array<i64: 2>, scalar_prefetch = 0 : i64, scratch_operands = 0 : i64, tpu.core_type = #tpu.core_type<tc>, window_params = [{transform_indices = @transform_0, window_bounds = array<i64: 128, 128>}, {pipeline_mode = #tpu.pipeline_mode<synchronous>, transform_indices = @transform_1, window_bounds = array<i64: 128, 128>}, {pipeline_mode = #tpu.pipeline_mode<synchronous>, transform_indices = @transform_2, window_bounds = array<i64: 1, 128>}, {pipeline_mode = #tpu.pipeline_mode<synchronous>, transform_indices = @transform_3, window_bounds = array<i64: 128, 128>}, {pipeline_mode = #tpu.pipeline_mode<synchronous>, transform_indices = @transform_4, window_bounds = array<i64: 1, 128>}, {pipeline_mode = #tpu.pipeline_mode<synchronous>, transform_indices = @transform_5, window_bounds = array<i64: 128, 128>}, {pipeline_mode = #tpu.pipeline_mode<synchronous>, transform_indices = @transform_6, window_bounds = array<i64: 1, 128>}, {pipeline_mode = #tpu.pipeline_mode<synchronous>, transform_indices = @transform_7, window_bounds = array<i64: 128, 128>}, {pipeline_mode = #tpu.pipeline_mode<synchronous>, transform_indices = @transform_8, window_bounds = array<i64: 1, 128>}, {pipeline_mode = #tpu.pipeline_mode<synchronous>, transform_indices = @transform_9, window_bounds = array<i64: 128, 128>}, {pipeline_mode = #tpu.pipeline_mode<synchronous>, transform_indices = @transform_10, window_bounds = array<i64: 1, 128>}, {transform_indices = @transform_11, window_bounds = array<i64: 128, 128>}]} {
    %c0 = arith.constant 0 : index
    %c0_0 = arith.constant 0 : index
    %0 = vector.load %arg1[%c0, %c0_0] : memref<128x128xbf16, #tpu.memory_space<vmem>>, vector<128x128xbf16>
    %c0_1 = arith.constant 0 : index
    %c0_2 = arith.constant 0 : index
    %1 = vector.load %arg2[%c0_1, %c0_2] : memref<128x128xbf16, #tpu.memory_space<vmem>>, vector<128x128xbf16>
    %cst = arith.constant dense<0.000000e+00> : vector<128x128xf32>
    %2 = tpu.matmul %0, %1, %cst {dimension_numbers = #tpu.dot_dimension_numbers<[1], [0], [0], [1], [0, 0, 1, 1], [], []>} : vector<128x128xbf16>, vector<128x128xbf16>, vector<128x128xf32> -> vector<128x128xf32>
    %c0_3 = arith.constant 0 : index
    %c0_4 = arith.constant 0 : index
    %3 = vector.load %arg3[%c0_3, %c0_4] : memref<1x128xf32, #tpu.memory_space<vmem>>, vector<1x128xf32>
    %4 = vector.broadcast %3 : vector<1x128xf32> to vector<128x128xf32>
    %5 = arith.addf %2, %4 : vector<128x128xf32>
    %cst_5 = arith.constant 0.000000e+00 : f32
    %6 = vector.broadcast %cst_5 : f32 to vector<128x128xf32>
    %7 = arith.maximumf %5, %6 : vector<128x128xf32>
    %8 = arith.truncf %7 : vector<128x128xf32> to vector<128x128xbf16>
    %c0_6 = arith.constant 0 : index
    %c0_7 = arith.constant 0 : index
    %9 = vector.load %arg4[%c0_6, %c0_7] : memref<128x128xbf16, #tpu.memory_space<vmem>>, vector<128x128xbf16>
    %cst_8 = arith.constant dense<0.000000e+00> : vector<128x128xf32>
    %10 = tpu.matmul %8, %9, %cst_8 {dimension_numbers = #tpu.dot_dimension_numbers<[1], [0], [0], [1], [0, 0, 1, 1], [], []>} : vector<128x128xbf16>, vector<128x128xbf16>, vector<128x128xf32> -> vector<128x128xf32>
    %c0_9 = arith.constant 0 : index
    %c0_10 = arith.constant 0 : index
    %11 = vector.load %arg5[%c0_9, %c0_10] : memref<1x128xf32, #tpu.memory_space<vmem>>, vector<1x128xf32>
    %12 = vector.broadcast %11 : vector<1x128xf32> to vector<128x128xf32>
    %13 = arith.addf %10, %12 : vector<128x128xf32>
    %cst_11 = arith.constant 0.000000e+00 : f32
    %14 = vector.broadcast %cst_11 : f32 to vector<128x128xf32>
    %15 = arith.maximumf %13, %14 : vector<128x128xf32>
    %16 = arith.truncf %15 : vector<128x128xf32> to vector<128x128xbf16>
    %c0_12 = arith.constant 0 : index
    %c0_13 = arith.constant 0 : index
    %17 = vector.load %arg6[%c0_12, %c0_13] : memref<128x128xbf16, #tpu.memory_space<vmem>>, vector<128x128xbf16>
    %cst_14 = arith.constant dense<0.000000e+00> : vector<128x128xf32>
    %18 = tpu.matmul %16, %17, %cst_14 {dimension_numbers = #tpu.dot_dimension_numbers<[1], [0], [0], [1], [0, 0, 1, 1], [], []>} : vector<128x128xbf16>, vector<128x128xbf16>, vector<128x128xf32> -> vector<128x128xf32>
    %c0_15 = arith.constant 0 : index
    %c0_16 = arith.constant 0 : index
    %19 = vector.load %arg7[%c0_15, %c0_16] : memref<1x128xf32, #tpu.memory_space<vmem>>, vector<1x128xf32>
    %20 = vector.broadcast %19 : vector<1x128xf32> to vector<128x128xf32>
    %21 = arith.addf %18, %20 : vector<128x128xf32>
    %cst_17 = arith.constant 0.000000e+00 : f32
    %22 = vector.broadcast %cst_17 : f32 to vector<128x128xf32>
    %23 = arith.maximumf %21, %22 : vector<128x128xf32>
    %24 = arith.truncf %23 : vector<128x128xf32> to vector<128x128xbf16>
    %c0_18 = arith.constant 0 : index
    %c0_19 = arith.constant 0 : index
    %25 = vector.load %arg8[%c0_18, %c0_19] : memref<128x128xbf16, #tpu.memory_space<vmem>>, vector<128x128xbf16>
    %cst_20 = arith.constant dense<0.000000e+00> : vector<128x128xf32>
    %26 = tpu.matmul %24, %25, %cst_20 {dimension_numbers = #tpu.dot_dimension_numbers<[1], [0], [0], [1], [0, 0, 1, 1], [], []>} : vector<128x128xbf16>, vector<128x128xbf16>, vector<128x128xf32> -> vector<128x128xf32>
    %c0_21 = arith.constant 0 : index
    %c0_22 = arith.constant 0 : index
    %27 = vector.load %arg9[%c0_21, %c0_22] : memref<1x128xf32, #tpu.memory_space<vmem>>, vector<1x128xf32>
    %28 = vector.broadcast %27 : vector<1x128xf32> to vector<128x128xf32>
    %29 = arith.addf %26, %28 : vector<128x128xf32>
    %cst_23 = arith.constant 0.000000e+00 : f32
    %30 = vector.broadcast %cst_23 : f32 to vector<128x128xf32>
    %31 = arith.maximumf %29, %30 : vector<128x128xf32>
    %32 = arith.truncf %31 : vector<128x128xf32> to vector<128x128xbf16>
    %c0_24 = arith.constant 0 : index
    %c0_25 = arith.constant 0 : index
    %33 = vector.load %arg10[%c0_24, %c0_25] : memref<128x128xbf16, #tpu.memory_space<vmem>>, vector<128x128xbf16>
    %cst_26 = arith.constant dense<0.000000e+00> : vector<128x128xf32>
    %34 = tpu.matmul %32, %33, %cst_26 {dimension_numbers = #tpu.dot_dimension_numbers<[1], [0], [0], [1], [0, 0, 1, 1], [], []>} : vector<128x128xbf16>, vector<128x128xbf16>, vector<128x128xf32> -> vector<128x128xf32>
    %c0_27 = arith.constant 0 : index
    %c0_28 = arith.constant 0 : index
    %35 = vector.load %arg11[%c0_27, %c0_28] : memref<1x128xf32, #tpu.memory_space<vmem>>, vector<1x128xf32>
    %36 = vector.broadcast %35 : vector<1x128xf32> to vector<128x128xf32>
    %37 = arith.addf %34, %36 : vector<128x128xf32>
    %38 = math.tanh %37 : vector<128x128xf32>
    %c0_29 = arith.constant 0 : index
    %c0_30 = arith.constant 0 : index
    %39 = vector.load %arg12[%c0_29, %c0_30] : memref<128x128xf32, #tpu.memory_space<vmem>>, vector<128x128xf32>
    tpu.vector_store %arg12[%c0_29, %c0_30], %38 {strides = array<i32>} : memref<128x128xf32, #tpu.memory_space<vmem>>, vector<128x128xf32>,
    return
  }
  func.func @transform_0(%arg0: i32) -> (i32, i32) {
    %c0_i32 = arith.constant 0 : i32
    %c0_i32_0 = arith.constant 0 : i32
    return %arg0, %c0_i32 : i32, i32
  }
  func.func @transform_1(%arg0: i32) -> (i32, i32) {
    %c0_i32 = arith.constant 0 : i32
    %c0_i32_0 = arith.constant 0 : i32
    %c0_i32_1 = arith.constant 0 : i32
    return %c0_i32, %c0_i32_0 : i32, i32
  }
  func.func @transform_2(%arg0: i32) -> (i32, i32) {
    %c0_i32 = arith.constant 0 : i32
    %c0_i32_0 = arith.constant 0 : i32
    %c0_i32_1 = arith.constant 0 : i32
    return %c0_i32, %c0_i32_0 : i32, i32
  }
  func.func @transform_3(%arg0: i32) -> (i32, i32) {
    %c0_i32 = arith.constant 0 : i32
    %c0_i32_0 = arith.constant 0 : i32
    %c0_i32_1 = arith.constant 0 : i32
    return %c0_i32, %c0_i32_0 : i32, i32
  }
  func.func @transform_4(%arg0: i32) -> (i32, i32) {
    %c0_i32 = arith.constant 0 : i32
    %c0_i32_0 = arith.constant 0 : i32
    %c0_i32_1 = arith.constant 0 : i32
    return %c0_i32, %c0_i32_0 : i32, i32
  }
  func.func @transform_5(%arg0: i32) -> (i32, i32) {
    %c0_i32 = arith.constant 0 : i32
    %c0_i32_0 = arith.constant 0 : i32
    %c0_i32_1 = arith.constant 0 : i32
    return %c0_i32, %c0_i32_0 : i32, i32
  }
  func.func @transform_6(%arg0: i32) -> (i32, i32) {
    %c0_i32 = arith.constant 0 : i32
    %c0_i32_0 = arith.constant 0 : i32
    %c0_i32_1 = arith.constant 0 : i32
    return %c0_i32, %c0_i32_0 : i32, i32
  }
  func.func @transform_7(%arg0: i32) -> (i32, i32) {
    %c0_i32 = arith.constant 0 : i32
    %c0_i32_0 = arith.constant 0 : i32
    %c0_i32_1 = arith.constant 0 : i32
    return %c0_i32, %c0_i32_0 : i32, i32
  }
  func.func @transform_8(%arg0: i32) -> (i32, i32) {
    %c0_i32 = arith.constant 0 : i32
    %c0_i32_0 = arith.constant 0 : i32
    %c0_i32_1 = arith.constant 0 : i32
    return %c0_i32, %c0_i32_0 : i32, i32
  }
  func.func @transform_9(%arg0: i32) -> (i32, i32) {
    %c0_i32 = arith.constant 0 : i32
    %c0_i32_0 = arith.constant 0 : i32
    %c0_i32_1 = arith.constant 0 : i32
    return %c0_i32, %c0_i32_0 : i32, i32
  }
  func.func @transform_10(%arg0: i32) -> (i32, i32) {
    %c0_i32 = arith.constant 0 : i32
    %c0_i32_0 = arith.constant 0 : i32
    %c0_i32_1 = arith.constant 0 : i32
    return %c0_i32, %c0_i32_0 : i32, i32
  }
  func.func @transform_11(%arg0: i32) -> (i32, i32) {
    %c0_i32 = arith.constant 0 : i32
    %c0_i32_0 = arith.constant 0 : i32
    return %arg0, %c0_i32 : i32, i32
  }
}

</mosaic_0001>

<llo_original>
// kernel: tpu_custom_call.1
$region0: #{tpu_custom_call.1}
  #allocation0 [shape = 'u32[]', space=smem, size = 0x4, offset = 0x4, fixed_abs, tag = 'smem constant byte address 0x4 - core index']
  #allocation1 [shape = 'u32[144,128]{1,0:T(1,128)}', space=vmem, size = 0x12000, scoped, tag = 'internal scratch']
  %s0 = inlined_call_operand.hbm [shape: bf16[256,128], index: 0, kind: input, shape index: {}]
  %s1 = inlined_call_operand.hbm [shape: bf16[128,128], index: 1, kind: input, shape index: {}]
  %s2 = inlined_call_operand.vmem [shape: f32[1,128], index: 2, kind: input, shape index: {}]
  %s3 = inlined_call_operand.hbm [shape: bf16[128,128], index: 3, kind: input, shape index: {}]
  %s4 = inlined_call_operand.vmem [shape: f32[1,128], index: 4, kind: input, shape index: {}]
  %s5 = inlined_call_operand.hbm [shape: bf16[128,128], index: 5, kind: input, shape index: {}]
  %s6 = inlined_call_operand.vmem [shape: f32[1,128], index: 6, kind: input, shape index: {}]
  %s7 = inlined_call_operand.hbm [shape: bf16[128,128], index: 7, kind: input, shape index: {}]
  %s8 = inlined_call_operand.vmem [shape: f32[1,128], index: 8, kind: input, shape index: {}]
  %s9 = inlined_call_operand.hbm [shape: bf16[128,128], index: 9, kind: input, shape index: {}]
  %s10 = inlined_call_operand.vmem [shape: f32[1,128], index: 10, kind: input, shape index: {}]
  %s11 = inlined_call_operand.hbm [shape: f32[256,128], index: 11, kind: output, shape index: {}]
  %s12 = sld [smem:[#allocation0]]
  $region101: #{tpu_custom_call.1} parent=0
    _
  %s14 = ssub.s32 1, %s12
  %s15 = scalar_select 0, %s14, %s12
  $region1: #{tpu_custom_call.1} parent=0
    #allocation2 [shape = 'u8[65536]{0}', space=vmem, size = 0x10000, scoped, tag = 'input window, operand 0']
    #allocation3 [shape = 's32[2]{0}', space=sflag, size = 0x8, scoped, tag = 'scoped memory for tpu_custom_call.1']
    #allocation4 [shape = 's32[2]{0}', space=sflag, size = 0x8, scoped, tag = 'scoped memory for tpu_custom_call.1']
    #allocation5 [shape = 'u8[32768]{0}', space=vmem, size = 0x8000, scoped, tag = 'input window, operand 1, single buffered']
    #allocation6 [shape = 's32[1]{0}', space=sflag, size = 0x4, scoped, tag = 'scoped memory for tpu_custom_call.1']
    #allocation7 [shape = 'u8[32768]{0}', space=vmem, size = 0x8000, scoped, tag = 'input window, operand 3, single buffered']
    #allocation8 [shape = 'u8[32768]{0}', space=vmem, size = 0x8000, scoped, tag = 'input window, operand 5, single buffered']
    #allocation9 [shape = 's32[1]{0}', space=sflag, size = 0x4, scoped, tag = 'scoped memory for tpu_custom_call.1']
    #allocation10 [shape = 'u8[32768]{0}', space=vmem, size = 0x8000, scoped, tag = 'input window, operand 7, single buffered']
    #allocation11 [shape = 'u8[32768]{0}', space=vmem, size = 0x8000, scoped, tag = 'input window, operand 9, single buffered']
    #allocation12 [shape = 's32[1]{0}', space=sflag, size = 0x4, scoped, tag = 'scoped memory for tpu_custom_call.1']
    #allocation13 [shape = 'u8[131072]{0}', space=vmem, size = 0x20000, scoped, tag = 'output window, operand 0']
    %16 = vsyncpa [#allocation3], 0
    %s17 = scalar_lea.sflag [#allocation3], 1
    %18 = vsyncpa %s17, 0
    %19 = vsyncpa [#allocation6], 0
    %20 = vsyncpa [#allocation9], 0
    %21 = vsyncpa [#allocation12], 0
    %22 = vsyncpa [#allocation4], 0
    %s23 = scalar_lea.sflag [#allocation4], 1
    %24 = vsyncpa %s23, 0
    loop: start=0, step=1, limit=4
    $region2: #{tpu_custom_call.1} parent=1 // loop_pre_header
      _
    $region3: #{tpu_custom_call.1} parent=1 // loop_header
      %s26 = sphi 0, %s30
      %p27 = scmp.ge.s32.totalorder %s26, 4
      %s36 = sphi 0, %s38
      %s39 = sphi 0, %s36
      %s40 = sphi 0, %s39
      %s56 = sphi 0, %s40
      %s60 = sphi 0, %s60
      %s62 = sphi 0, %s60
      %s63 = sphi 0, %s62
      %s77 = sphi 0, %s63
      %s81 = sphi 0, %s81
      %s83 = sphi 0, %s81
      %s84 = sphi 0, %s83
      %s98 = sphi 0, %s84
      %s102 = sphi 0, %s102
      %s104 = sphi 0, %s102
      %s105 = sphi 0, %s104
      %s119 = sphi 0, %s105
      %s123 = sphi 0, %s123
      %s125 = sphi 0, %s123
      %s126 = sphi 0, %s125
      %s140 = sphi 0, %s126
      %s144 = sphi 0, %s144
      %s146 = sphi 0, %s144
      %s147 = sphi 0, %s146
      %s161 = sphi 0, %s147
      %s165 = sphi 0, %s165
      %s167 = sphi 0, %s165
      %s168 = sphi 0, %s167
      %s182 = sphi 0, %s168
      %s186 = sphi 0, %s186
      %s188 = sphi 0, %s186
      %s189 = sphi 0, %s188
      %s203 = sphi 0, %s189
      %s207 = sphi 0, %s207
      %s209 = sphi 0, %s207
      %s210 = sphi 0, %s209
      %s224 = sphi 0, %s210
      %s228 = sphi 0, %s228
      %s230 = sphi 0, %s228
      %s231 = sphi 0, %s230
      %s245 = sphi 0, %s231
      %s249 = sphi 0, %s249
      %s251 = sphi 0, %s249
      %s252 = sphi 0, %s251
      %s266 = sphi 0, %s252
      %s272 = sphi 0, %s274
      %s275 = sphi 0, %s272
      %s276 = sphi 0, %s275
      %s292 = sphi 0, %s276
    $region4: #{tpu_custom_call.1} parent=1 // loop_header_branch
      %29 = sbr.rel (%p27) target = $region8
    $region5: #{tpu_custom_call.1} parent=1 // loop_body
      %s31 = ssub.s32 %s26, 1
      %s32 = ssub.s32 %s26, 2
      %s33 = sadd.s32 %s26, 1
      %s34 = ssub.s32 %s26, %s33
      %p35 = scmp.eq.s32.totalorder %s34, 0
      %s37 = sadd.s32 %s36, 1
      %s38 = scalar_select %p35, %s36, %s37
      %p41 = pneg %p35
      %p42 = scmp.eq.s32.totalorder %s26, 1
      %p43 = por %p41, %p42
      %p44 = scmp.ne.s32.totalorder %s36, %s39
      %p45 = scmp.eq.s32.totalorder %s26, 0
      %p46 = por %p44, %p45
      %p47 = scmp.ne.s32.totalorder %s36, %s39
      %p48 = scmp.eq.s32.totalorder %s31, 1
      %p49 = por %p47, %p48
      %p50 = scmp.ne.s32.totalorder %s39, %s40
      %p51 = scmp.eq.s32.totalorder %s31, 0
      %p52 = por %p50, %p51
      %p53 = scmp.ne.s32.totalorder %s39, %s40
      %p54 = scmp.eq.s32.totalorder %s32, 1
      %p55 = por %p53, %p54
      %p57 = scmp.ne.s32.totalorder %s40, %s56
      %p58 = scmp.eq.s32.totalorder %s32, 0
      %p59 = por %p57, %p58
      %s61 = sadd.s32 %s60, 1
      %p64 = scmp.eq.s32.totalorder %s26, 1
      %p65 = scmp.ne.s32.totalorder %s60, %s62
      %p66 = scmp.eq.s32.totalorder %s26, 0
      %p67 = por %p65, %p66
      %p68 = scmp.ne.s32.totalorder %s60, %s62
      %p69 = scmp.eq.s32.totalorder %s31, 1
      %p70 = por %p68, %p69
      %p71 = scmp.ne.s32.totalorder %s62, %s63
      %p72 = scmp.eq.s32.totalorder %s31, 0
      %p73 = por %p71, %p72
      %p74 = scmp.ne.s32.totalorder %s62, %s63
      %p75 = scmp.eq.s32.totalorder %s32, 1
      %p76 = por %p74, %p75
      %p78 = scmp.ne.s32.totalorder %s63, %s77
      %p79 = scmp.eq.s32.totalorder %s32, 0
      %p80 = por %p78, %p79
      %s82 = sadd.s32 %s81, 1
      %p85 = scmp.eq.s32.totalorder %s26, 1
      %p86 = scmp.ne.s32.totalorder %s81, %s83
      %p87 = scmp.eq.s32.totalorder %s26, 0
      %p88 = por %p86, %p87
      %p89 = scmp.ne.s32.totalorder %s81, %s83
      %p90 = scmp.eq.s32.totalorder %s31, 1
      %p91 = por %p89, %p90
      %p92 = scmp.ne.s32.totalorder %s83, %s84
      %p93 = scmp.eq.s32.totalorder %s31, 0
      %p94 = por %p92, %p93
      %p95 = scmp.ne.s32.totalorder %s83, %s84
      %p96 = scmp.eq.s32.totalorder %s32, 1
      %p97 = por %p95, %p96
      %p99 = scmp.ne.s32.totalorder %s84, %s98
      %p100 = scmp.eq.s32.totalorder %s32, 0
      %p101 = por %p99, %p100
      %s103 = sadd.s32 %s102, 1
      %p106 = scmp.eq.s32.totalorder %s26, 1
      %p107 = scmp.ne.s32.totalorder %s102, %s104
      %p108 = scmp.eq.s32.totalorder %s26, 0
      %p109 = por %p107, %p108
      %p110 = scmp.ne.s32.totalorder %s102, %s104
      %p111 = scmp.eq.s32.totalorder %s31, 1
      %p112 = por %p110, %p111
      %p113 = scmp.ne.s32.totalorder %s104, %s105
      %p114 = scmp.eq.s32.totalorder %s31, 0
      %p115 = por %p113, %p114
      %p116 = scmp.ne.s32.totalorder %s104, %s105
      %p117 = scmp.eq.s32.totalorder %s32, 1
      %p118 = por %p116, %p117
      %p120 = scmp.ne.s32.totalorder %s105, %s119
      %p121 = scmp.eq.s32.totalorder %s32, 0
      %p122 = por %p120, %p121
      %s124 = sadd.s32 %s123, 1
      %p127 = scmp.eq.s32.totalorder %s26, 1
      %p128 = scmp.ne.s32.totalorder %s123, %s125
      %p129 = scmp.eq.s32.totalorder %s26, 0
      %p130 = por %p128, %p129
      %p131 = scmp.ne.s32.totalorder %s123, %s125
      %p132 = scmp.eq.s32.totalorder %s31, 1
      %p133 = por %p131, %p132
      %p134 = scmp.ne.s32.totalorder %s125, %s126
      %p135 = scmp.eq.s32.totalorder %s31, 0
      %p136 = por %p134, %p135
      %p137 = scmp.ne.s32.totalorder %s125, %s126
      %p138 = scmp.eq.s32.totalorder %s32, 1
      %p139 = por %p137, %p138
      %p141 = scmp.ne.s32.totalorder %s126, %s140
      %p142 = scmp.eq.s32.totalorder %s32, 0
      %p143 = por %p141, %p142
      %s145 = sadd.s32 %s144, 1
      %p148 = scmp.eq.s32.totalorder %s26, 1
      %p149 = scmp.ne.s32.totalorder %s144, %s146
      %p150 = scmp.eq.s32.totalorder %s26, 0
      %p151 = por %p149, %p150
      %p152 = scmp.ne.s32.totalorder %s144, %s146
      %p153 = scmp.eq.s32.totalorder %s31, 1
      %p154 = por %p152, %p153
      %p155 = scmp.ne.s32.totalorder %s146, %s147
      %p156 = scmp.eq.s32.totalorder %s31, 0
      %p157 = por %p155, %p156
      %p158 = scmp.ne.s32.totalorder %s146, %s147
      %p159 = scmp.eq.s32.totalorder %s32, 1
      %p160 = por %p158, %p159
      %p162 = scmp.ne.s32.totalorder %s147, %s161
      %p163 = scmp.eq.s32.totalorder %s32, 0
      %p164 = por %p162, %p163
      %s166 = sadd.s32 %s165, 1
      %p169 = scmp.eq.s32.totalorder %s26, 1
      %p170 = scmp.ne.s32.totalorder %s165, %s167
      %p171 = scmp.eq.s32.totalorder %s26, 0
      %p172 = por %p170, %p171
      %p173 = scmp.ne.s32.totalorder %s165, %s167
      %p174 = scmp.eq.s32.totalorder %s31, 1
      %p175 = por %p173, %p174
      %p176 = scmp.ne.s32.totalorder %s167, %s168
      %p177 = scmp.eq.s32.totalorder %s31, 0
      %p178 = por %p176, %p177
      %p179 = scmp.ne.s32.totalorder %s167, %s168
      %p180 = scmp.eq.s32.totalorder %s32, 1
      %p181 = por %p179, %p180
      %p183 = scmp.ne.s32.totalorder %s168, %s182
      %p184 = scmp.eq.s32.totalorder %s32, 0
      %p185 = por %p183, %p184
      %s187 = sadd.s32 %s186, 1
      %p190 = scmp.eq.s32.totalorder %s26, 1
      %p191 = scmp.ne.s32.totalorder %s186, %s188
      %p192 = scmp.eq.s32.totalorder %s26, 0
      %p193 = por %p191, %p192
      %p194 = scmp.ne.s32.totalorder %s186, %s188
      %p195 = scmp.eq.s32.totalorder %s31, 1
      %p196 = por %p194, %p195
      %p197 = scmp.ne.s32.totalorder %s188, %s189
      %p198 = scmp.eq.s32.totalorder %s31, 0
      %p199 = por %p197, %p198
      %p200 = scmp.ne.s32.totalorder %s188, %s189
      %p201 = scmp.eq.s32.totalorder %s32, 1
      %p202 = por %p200, %p201
      %p204 = scmp.ne.s32.totalorder %s189, %s203
      %p205 = scmp.eq.s32.totalorder %s32, 0
      %p206 = por %p204, %p205
      %s208 = sadd.s32 %s207, 1
      %p211 = scmp.eq.s32.totalorder %s26, 1
      %p212 = scmp.ne.s32.totalorder %s207, %s209
      %p213 = scmp.eq.s32.totalorder %s26, 0
      %p214 = por %p212, %p213
      %p215 = scmp.ne.s32.totalorder %s207, %s209
      %p216 = scmp.eq.s32.totalorder %s31, 1
      %p217 = por %p215, %p216
      %p218 = scmp.ne.s32.totalorder %s209, %s210
      %p219 = scmp.eq.s32.totalorder %s31, 0
      %p220 = por %p218, %p219
      %p221 = scmp.ne.s32.totalorder %s209, %s210
      %p222 = scmp.eq.s32.totalorder %s32, 1
      %p223 = por %p221, %p222
      %p225 = scmp.ne.s32.totalorder %s210, %s224
      %p226 = scmp.eq.s32.totalorder %s32, 0
      %p227 = por %p225, %p226
      %s229 = sadd.s32 %s228, 1
      %p232 = scmp.eq.s32.totalorder %s26, 1
      %p233 = scmp.ne.s32.totalorder %s228, %s230
      %p234 = scmp.eq.s32.totalorder %s26, 0
      %p235 = por %p233, %p234
      %p236 = scmp.ne.s32.totalorder %s228, %s230
      %p237 = scmp.eq.s32.totalorder %s31, 1
      %p238 = por %p236, %p237
      %p239 = scmp.ne.s32.totalorder %s230, %s231
      %p240 = scmp.eq.s32.totalorder %s31, 0
      %p241 = por %p239, %p240
      %p242 = scmp.ne.s32.totalorder %s230, %s231
      %p243 = scmp.eq.s32.totalorder %s32, 1
      %p244 = por %p242, %p243
      %p246 = scmp.ne.s32.totalorder %s231, %s245
      %p247 = scmp.eq.s32.totalorder %s32, 0
      %p248 = por %p246, %p247
      %s250 = sadd.s32 %s249, 1
      %p253 = scmp.eq.s32.totalorder %s26, 1
      %p254 = scmp.ne.s32.totalorder %s249, %s251
      %p255 = scmp.eq.s32.totalorder %s26, 0
      %p256 = por %p254, %p255
      %p257 = scmp.ne.s32.totalorder %s249, %s251
      %p258 = scmp.eq.s32.totalorder %s31, 1
      %p259 = por %p257, %p258
      %p260 = scmp.ne.s32.totalorder %s251, %s252
      %p261 = scmp.eq.s32.totalorder %s31, 0
      %p262 = por %p260, %p261
      %p263 = scmp.ne.s32.totalorder %s251, %s252
      %p264 = scmp.eq.s32.totalorder %s32, 1
      %p265 = por %p263, %p264
      %p267 = scmp.ne.s32.totalorder %s252, %s266
      %p268 = scmp.eq.s32.totalorder %s32, 0
      %p269 = por %p267, %p268
      %s270 = ssub.s32 %s26, %s33
      %p271 = scmp.eq.s32.totalorder %s270, 0
      %s273 = sadd.s32 %s272, 1
      %s274 = scalar_select %p271, %s272, %s273
      %p277 = pneg %p271
      %p278 = scmp.eq.s32.totalorder %s26, 1
      %p279 = por %p277, %p278
      %p280 = scmp.ne.s32.totalorder %s272, %s275
      %p281 = scmp.eq.s32.totalorder %s26, 0
      %p282 = por %p280, %p281
      %p283 = scmp.ne.s32.totalorder %s272, %s275
      %p284 = scmp.eq.s32.totalorder %s31, 1
      %p285 = por %p283, %p284
      %p286 = scmp.ne.s32.totalorder %s275, %s276
      %p287 = scmp.eq.s32.totalorder %s31, 0
      %p288 = por %p286, %p287
      %p289 = scmp.ne.s32.totalorder %s275, %s276
      %p290 = scmp.eq.s32.totalorder %s32, 1
      %p291 = por %p289, %p290
      %p293 = scmp.ne.s32.totalorder %s276, %s292
      %p294 = scmp.eq.s32.totalorder %s32, 0
      %p295 = por %p293, %p294
      %p296 = scmp.le.s32.totalorder 1, %s26
      %p297 = scmp.lt.s32.totalorder %s26, 3
      %p298 = pnand %p296, %p297
      %p299 = pneg %p298
      // Predicated region
      $region9: #{tpu_custom_call.1} parent=5 // pred_check
        _
      $region10: #{tpu_custom_call.1} parent=5 // pred_check_branch
        %301 = sbr.rel (%p298) target = $region12
      $region11: #{tpu_custom_call.1} parent=5 // pred_region
        %s302 = ssub.s32 %s26, 1
        // Predicated region
        $region13: #{tpu_custom_call.1} parent=11 // pred_check
          %p303 = pneg %p73
        $region14: #{tpu_custom_call.1} parent=11 // pred_check_branch
          %305 = sbr.rel (%p303) target = $region16
        $region15: #{tpu_custom_call.1} parent=11 // pred_region
          %s307 = ssub.s32 1024, 1024
          %308 = vsyncadd [#allocation6], %s307
          %s309 = sshll.u32 [#allocation5], 4
          %s310 = int_to_ptr.vmem [resolvable:$true] %s309
          %315 = dma.hbm_to_vmem [thread:$0]  %s1, 1024, %s310, [#allocation6], 64, 64, 4
        $region16: #{tpu_custom_call.1} parent=11 // pred_fallthru
          _
        // Predicated region
        $region17: #{tpu_custom_call.1} parent=11 // pred_check
          %p316 = pneg %p94
        $region18: #{tpu_custom_call.1} parent=11 // pred_check_branch
          %318 = sbr.rel (%p316) target = $region20
        $region19: #{tpu_custom_call.1} parent=11 // pred_region
          _
        $region20: #{tpu_custom_call.1} parent=11 // pred_fallthru
          _
        // Predicated region
        $region21: #{tpu_custom_call.1} parent=11 // pred_check
          %p319 = pneg %p115
        $region22: #{tpu_custom_call.1} parent=11 // pred_check_branch
          %321 = sbr.rel (%p319) target = $region24
        $region23: #{tpu_custom_call.1} parent=11 // pred_region
          %s323 = ssub.s32 1024, 1024
          %324 = vsyncadd [#allocation6], %s323
          %s325 = sshll.u32 [#allocation7], 4
          %s326 = int_to_ptr.vmem [resolvable:$true] %s325
          %331 = dma.hbm_to_vmem [thread:$0]  %s3, 1024, %s326, [#allocation6], 64, 64, 4
        $region24: #{tpu_custom_call.1} parent=11 // pred_fallthru
          _
        // Predicated region
        $region25: #{tpu_custom_call.1} parent=11 // pred_check
          %p332 = pneg %p136
        $region26: #{tpu_custom_call.1} parent=11 // pred_check_branch
          %334 = sbr.rel (%p332) target = $region28
        $region27: #{tpu_custom_call.1} parent=11 // pred_region
          _
        $region28: #{tpu_custom_call.1} parent=11 // pred_fallthru
          _
        // Predicated region
        $region29: #{tpu_custom_call.1} parent=11 // pred_check
          %p335 = pneg %p157
        $region30: #{tpu_custom_call.1} parent=11 // pred_check_branch
          %337 = sbr.rel (%p335) target = $region32
        $region31: #{tpu_custom_call.1} parent=11 // pred_region
          %s339 = ssub.s32 1024, 1024
          %340 = vsyncadd [#allocation9], %s339
          %s341 = sshll.u32 [#allocation8], 4
          %s342 = int_to_ptr.vmem [resolvable:$true] %s341
          %347 = dma.hbm_to_vmem [thread:$0]  %s5, 1024, %s342, [#allocation9], 64, 64, 4
        $region32: #{tpu_custom_call.1} parent=11 // pred_fallthru
          _
        // Predicated region
        $region33: #{tpu_custom_call.1} parent=11 // pred_check
          %p348 = pneg %p178
        $region34: #{tpu_custom_call.1} parent=11 // pred_check_branch
          %350 = sbr.rel (%p348) target = $region36
        $region35: #{tpu_custom_call.1} parent=11 // pred_region
          _
        $region36: #{tpu_custom_call.1} parent=11 // pred_fallthru
          _
        // Predicated region
        $region37: #{tpu_custom_call.1} parent=11 // pred_check
          %p351 = pneg %p199
        $region38: #{tpu_custom_call.1} parent=11 // pred_check_branch
          %353 = sbr.rel (%p351) target = $region40
        $region39: #{tpu_custom_call.1} parent=11 // pred_region
          %s355 = ssub.s32 1024, 1024
          %356 = vsyncadd [#allocation9], %s355
          %s357 = sshll.u32 [#allocation10], 4
          %s358 = int_to_ptr.vmem [resolvable:$true] %s357
          %363 = dma.hbm_to_vmem [thread:$0]  %s7, 1024, %s358, [#allocation9], 64, 64, 4
        $region40: #{tpu_custom_call.1} parent=11 // pred_fallthru
          _
        // Predicated region
        $region41: #{tpu_custom_call.1} parent=11 // pred_check
          %p364 = pneg %p220
        $region42: #{tpu_custom_call.1} parent=11 // pred_check_branch
          %366 = sbr.rel (%p364) target = $region44
        $region43: #{tpu_custom_call.1} parent=11 // pred_region
          _
        $region44: #{tpu_custom_call.1} parent=11 // pred_fallthru
          _
        // Predicated region
        $region45: #{tpu_custom_call.1} parent=11 // pred_check
          %p367 = pneg %p241
        $region46: #{tpu_custom_call.1} parent=11 // pred_check_branch
          %369 = sbr.rel (%p367) target = $region48
        $region47: #{tpu_custom_call.1} parent=11 // pred_region
          %s371 = ssub.s32 1024, 1024
          %372 = vsyncadd [#allocation12], %s371
          %s373 = sshll.u32 [#allocation11], 4
          %s374 = int_to_ptr.vmem [resolvable:$true] %s373
          %379 = dma.hbm_to_vmem [thread:$0]  %s9, 1024, %s374, [#allocation12], 64, 64, 4
        $region48: #{tpu_custom_call.1} parent=11 // pred_fallthru
          _
        // Predicated region
        $region49: #{tpu_custom_call.1} parent=11 // pred_check
          %p380 = pneg %p262
        $region50: #{tpu_custom_call.1} parent=11 // pred_check_branch
          %382 = sbr.rel (%p380) target = $region52
        $region51: #{tpu_custom_call.1} parent=11 // pred_region
          _
        $region52: #{tpu_custom_call.1} parent=11 // pred_fallthru
          _
      $region12: #{tpu_custom_call.1} parent=5 // pred_fallthru
        _
      %p383 = scmp.lt.s32.totalorder %s26, 2
      // Predicated region
      $region53: #{tpu_custom_call.1} parent=5 // pred_check
        %p384 = pneg %p383
      $region54: #{tpu_custom_call.1} parent=5 // pred_check_branch
        %386 = sbr.rel (%p384) target = $region56
      $region55: #{tpu_custom_call.1} parent=5 // pred_region
        // Predicated region
        $region57: #{tpu_custom_call.1} parent=55 // pred_check
          %p387 = pneg %p46
        $region58: #{tpu_custom_call.1} parent=55 // pred_check_branch
          %389 = sbr.rel (%p387) target = $region60
        $region59: #{tpu_custom_call.1} parent=55 // pred_region
          %s390 = sand.u32 %s36, 1
          %s391 = scalar_lea.sflag [#allocation3], %s390
          %s392 = sand.u32 %s36, 1
          %s393 = smul.addr %s392, 64
          %s394 = scalar_lea.vmem [#allocation2], %s393
          %s395 = smul.u32 16, %s26
          %s397 = ssub.s32 1024, 1024
          %398 = vsyncadd %s391, %s397
          %s399 = smul.addr %s395, 64
          %s400 = scalar_lea.hbm %s0, %s399
          %s401 = sshll.u32 %s394, 4
          %s402 = int_to_ptr.vmem [resolvable:$true] %s401
          %407 = dma.hbm_to_vmem [thread:$0]  %s400, 1024, %s402, %s391, 64, 64, 4
        $region60: #{tpu_custom_call.1} parent=55 // pred_fallthru
          _
      $region56: #{tpu_custom_call.1} parent=5 // pred_fallthru
        _
      %p408 = scmp.le.s32.totalorder 1, %s26
      %p409 = scmp.lt.s32.totalorder %s26, 3
      %p410 = pnand %p408, %p409
      %p411 = pneg %p410
      // Predicated region
      $region61: #{tpu_custom_call.1} parent=5 // pred_check
        _
      $region62: #{tpu_custom_call.1} parent=5 // pred_check_branch
        %413 = sbr.rel (%p410) target = $region64
      $region63: #{tpu_custom_call.1} parent=5 // pred_region
        %s414 = ssub.s32 %s26, 1
        %s415 = sand.u32 %s39, 1
        %s416 = scalar_lea.sflag [#allocation3], %s415
        %s417 = sand.u32 %s39, 1
        %s418 = smul.addr %s417, 64
        %s419 = scalar_lea.vmem [#allocation2], %s418
        // Predicated region
        $region65: #{tpu_custom_call.1} parent=63 // pred_check
          %p420 = pneg %p52
        $region66: #{tpu_custom_call.1} parent=63 // pred_check_branch
          %422 = sbr.rel (%p420) target = $region68
        $region67: #{tpu_custom_call.1} parent=63 // pred_region
          %423 = dma.done %s416, 1024
        $region68: #{tpu_custom_call.1} parent=63 // pred_fallthru
          _
        // Predicated region
        $region69: #{tpu_custom_call.1} parent=63 // pred_check
          %p424 = pneg %p73
        $region70: #{tpu_custom_call.1} parent=63 // pred_check_branch
          %426 = sbr.rel (%p424) target = $region72
        $region71: #{tpu_custom_call.1} parent=63 // pred_region
          %427 = dma.done [#allocation6], 1024
        $region72: #{tpu_custom_call.1} parent=63 // pred_fallthru
          _
        // Predicated region
        $region73: #{tpu_custom_call.1} parent=63 // pred_check
          %p428 = pneg %p115
        $region74: #{tpu_custom_call.1} parent=63 // pred_check_branch
          %430 = sbr.rel (%p428) target = $region76
        $region75: #{tpu_custom_call.1} parent=63 // pred_region
          %431 = dma.done [#allocation6], 1024
        $region76: #{tpu_custom_call.1} parent=63 // pred_fallthru
          _
        // Predicated region
        $region77: #{tpu_custom_call.1} parent=63 // pred_check
          %p432 = pneg %p157
        $region78: #{tpu_custom_call.1} parent=63 // pred_check_branch
          %434 = sbr.rel (%p432) target = $region80
        $region79: #{tpu_custom_call.1} parent=63 // pred_region
          %435 = dma.done [#allocation9], 1024
        $region80: #{tpu_custom_call.1} parent=63 // pred_fallthru
          _
        // Predicated region
        $region81: #{tpu_custom_call.1} parent=63 // pred_check
          %p436 = pneg %p199
        $region82: #{tpu_custom_call.1} parent=63 // pred_check_branch
          %438 = sbr.rel (%p436) target = $region84
        $region83: #{tpu_custom_call.1} parent=63 // pred_region
          %439 = dma.done [#allocation9], 1024
        $region84: #{tpu_custom_call.1} parent=63 // pred_fallthru
          _
        // Predicated region
        $region85: #{tpu_custom_call.1} parent=63 // pred_check
          %p440 = pneg %p241
        $region86: #{tpu_custom_call.1} parent=63 // pred_check_branch
          %442 = sbr.rel (%p440) target = $region88
        $region87: #{tpu_custom_call.1} parent=63 // pred_region
          %443 = dma.done [#allocation12], 1024
        $region88: #{tpu_custom_call.1} parent=63 // pred_fallthru
          _
        %s444 = sand.u32 %s39, 1
        %s445 = scalar_lea.sflag [#allocation3], %s444
        %s446 = sand.u32 %s39, 1
        %s447 = smul.addr %s446, 64
        %s448 = scalar_lea.vmem [#allocation2], %s447
        %p449 = pneg %p52
        %p450 = pneg %p49
        %p451 = pneg %p73
        %p452 = pneg %p70
        %p453 = pneg %p94
        %p454 = pneg %p91
        %p455 = pneg %p115
        %p456 = pneg %p112
        %p457 = pneg %p136
        %p458 = pneg %p133
        %p459 = pneg %p157
        %p460 = pneg %p154
        %p461 = pneg %p178
        %p462 = pneg %p175
        %p463 = pneg %p199
        %p464 = pneg %p196
        %p465 = pneg %p220
        %p466 = pneg %p217
        %p467 = pneg %p241
        %p468 = pneg %p238
        %p469 = pneg %p262
        %p470 = pneg %p259
        %p471 = pneg %p288
        %p472 = pneg %p285
        %s473 = sand.u32 %s275, 1
        %s474 = scalar_lea.sflag [#allocation4], %s473
        %s475 = sand.u32 %s275, 1
        %s476 = smul.addr %s475, 128
        %s477 = scalar_lea.vmem [#allocation13], %s476
        %s478 = smul.u32 16, %s31
        %s479 = smul.u32 16, %s31
        %v481 = vld [vmem:[%s419] sm:$0xf]
        %v482 = vld [vmem:[%s419 + $0x4] sm:$0xf]
        %v483 = vld [vmem:[%s419 + $0x8] sm:$0xf]
        %v484 = vld [vmem:[%s419 + $0xc] sm:$0xf]
        %v485 = vld [vmem:[%s419 + $0x10] sm:$0xf]
        %v486 = vld [vmem:[%s419 + $0x14] sm:$0xf]
        %v487 = vld [vmem:[%s419 + $0x18] sm:$0xf]
        %v488 = vld [vmem:[%s419 + $0x1c] sm:$0xf]
        %v489 = vld [vmem:[%s419 + $0x20] sm:$0xf]
        %v490 = vld [vmem:[%s419 + $0x24] sm:$0xf]
        %v491 = vld [vmem:[%s419 + $0x28] sm:$0xf]
        %v492 = vld [vmem:[%s419 + $0x2c] sm:$0xf]
        %v493 = vld [vmem:[%s419 + $0x30] sm:$0xf]
        %v494 = vld [vmem:[%s419 + $0x34] sm:$0xf]
        %v495 = vld [vmem:[%s419 + $0x38] sm:$0xf]
        %v496 = vld [vmem:[%s419 + $0x3c] sm:$0xf]
        %v497 = vld [vmem:[#allocation5] sm:$0xf]
        %v498 = vld [vmem:[#allocation5 + $0x4] sm:$0xf]
        %v499 = vld [vmem:[#allocation5 + $0x8] sm:$0xf]
        %v500 = vld [vmem:[#allocation5 + $0xc] sm:$0xf]
        %v501 = vld [vmem:[#allocation5 + $0x10] sm:$0xf]
        %v502 = vld [vmem:[#allocation5 + $0x14] sm:$0xf]
        %v503 = vld [vmem:[#allocation5 + $0x18] sm:$0xf]
        %v504 = vld [vmem:[#allocation5 + $0x1c] sm:$0xf]
        %v505 = vld [vmem:[#allocation5 + $0x20] sm:$0xf]
        %v506 = vld [vmem:[#allocation5 + $0x24] sm:$0xf]
        %v507 = vld [vmem:[#allocation5 + $0x28] sm:$0xf]
        %v508 = vld [vmem:[#allocation5 + $0x2c] sm:$0xf]
        %v509 = vld [vmem:[#allocation5 + $0x30] sm:$0xf]
        %v510 = vld [vmem:[#allocation5 + $0x34] sm:$0xf]
        %v511 = vld [vmem:[#allocation5 + $0x38] sm:$0xf]
        %v512 = vld [vmem:[#allocation5 + $0x3c] sm:$0xf]
        %v513 = vld [vmem:[%s2] sm:$0x1]
        %v515 = vlaneseq
        %v516 = vshrl.u32 %v515, 7
        %v517 = vsub.s32 0, %v516
        %v518 = vrot.slane %v513, %v517
        %v536 = vunpack.c.l.b16 %v481
        %v537 = vunpack.c.l.b16 %v482
        %v538 = vunpack.c.l.b16 %v483
        %v539 = vunpack.c.l.b16 %v484
        %v540 = vunpack.c.l.b16 %v485
        %v541 = vunpack.c.l.b16 %v486
        %v542 = vunpack.c.l.b16 %v487
        %v543 = vunpack.c.l.b16 %v488
        %v544 = vunpack.c.l.b16 %v489
        %v545 = vunpack.c.l.b16 %v490
        %v546 = vunpack.c.l.b16 %v491
        %v547 = vunpack.c.l.b16 %v492
        %v548 = vunpack.c.l.b16 %v493
        %v549 = vunpack.c.l.b16 %v494
        %v550 = vunpack.c.l.b16 %v495
        %v551 = vunpack.c.l.b16 %v496
        %v552 = vpack.c.b16 %v537, %v536
        %v553 = vpack.c.b16 %v539, %v538
        %v554 = vpack.c.b16 %v541, %v540
        %v555 = vpack.c.b16 %v543, %v542
        %v556 = vpack.c.b16 %v545, %v544
        %v557 = vpack.c.b16 %v547, %v546
        %v558 = vpack.c.b16 %v549, %v548
        %v559 = vpack.c.b16 %v551, %v550
        %v584 = vunpack.c.l.b16 %v497
        %v585 = vunpack.c.l.b16 %v498
        %v586 = vunpack.c.l.b16 %v499
        %v587 = vunpack.c.l.b16 %v500
        %v588 = vunpack.c.l.b16 %v501
        %v589 = vunpack.c.l.b16 %v502
        %v590 = vunpack.c.l.b16 %v503
        %v591 = vunpack.c.l.b16 %v504
        %v592 = vunpack.c.l.b16 %v505
        %v593 = vunpack.c.l.b16 %v506
        %v594 = vunpack.c.l.b16 %v507
        %v595 = vunpack.c.l.b16 %v508
        %v596 = vunpack.c.l.b16 %v509
        %v597 = vunpack.c.l.b16 %v510
        %v598 = vunpack.c.l.b16 %v511
        %v599 = vunpack.c.l.b16 %v512
        %v600 = vpack.c.b16 %v585, %v584
        %v601 = vpack.c.b16 %v587, %v586
        %v602 = vpack.c.b16 %v589, %v588
        %v603 = vpack.c.b16 %v591, %v590
        %v604 = vpack.c.b16 %v593, %v592
        %v605 = vpack.c.b16 %v595, %v594
        %v606 = vpack.c.b16 %v597, %v596
        %v607 = vpack.c.b16 %v599, %v598
        %616 = vmatprep.subr.bf16.mxu0 0
        %617 = vmatpush1.bf16.msra.mxu0 %v600
        %618 = vmatprep.subr.bf16.mxu0 0
        %619 = vmatpush1.bf16.msra.mxu0 %v601
        %620 = vmatprep.subr.bf16.mxu0 0
        %621 = vmatpush1.bf16.msra.mxu0 %v602
        %622 = vmatprep.subr.bf16.mxu0 0
        %623 = vmatpush1.bf16.msra.mxu0 %v603
        %624 = vmatprep.subr.bf16.mxu0 0
        %625 = vmatpush1.bf16.msra.mxu0 %v604
        %626 = vmatprep.subr.bf16.mxu0 0
        %627 = vmatpush1.bf16.msra.mxu0 %v605
        %628 = vmatprep.subr.bf16.mxu0 0
        %629 = vmatpush1.bf16.msra.mxu0 %v606
        %630 = vmatprep.subr.bf16.mxu0 0
        %631 = vmatpush1.bf16.msra.mxu0 %v607
        %632 = vmatprep.subr.bf16.mxu0 0
        %633 = vmatpush1.bf16.msra.mxu0 0
        %634 = vmatprep.subr.bf16.mxu0 0
        %635 = vmatpush1.bf16.msra.mxu0 0
        %636 = vmatprep.subr.bf16.mxu0 0
        %637 = vmatpush1.bf16.msra.mxu0 0
        %638 = vmatprep.subr.bf16.mxu0 0
        %639 = vmatpush1.bf16.msra.mxu0 0
        %640 = vmatprep.subr.bf16.mxu0 0
        %641 = vmatpush1.bf16.msra.mxu0 0
        %642 = vmatprep.subr.bf16.mxu0 0
        %643 = vmatpush1.bf16.msra.mxu0 0
        %644 = vmatprep.subr.bf16.mxu0 0
        %645 = vmatpush1.bf16.msra.mxu0 0
        %646 = vmatprep.subr.bf16.mxu0 0
        %647 = vmatpush1.bf16.msra.mxu0 0
        %648 = vmatprep.mubr.bf16.mxu0 0
        %649 = vmatmul.mubr.bf16.gmra.mrb[0].mxu0 %v552
        %v650 = vpop.f32.mrb[0].mxu0
        %v651 = vadd.f32 %v518, %v650
        %v652 = vpop.f32.mrb[0].mxu0
        %v653 = vpop.f32.mrb[0].mxu0
        %v654 = vadd.f32 %v518, %v653
        %v655 = vpop.f32.mrb[0].mxu0
        %656 = vmatprep.mubr.bf16.mxu0 0
        %657 = vmatmul.mubr.bf16.gmra.mrb[0].mxu0 %v553
        %v658 = vpop.f32.mrb[0].mxu0
        %v659 = vadd.f32 %v518, %v658
        %v660 = vpop.f32.mrb[0].mxu0
        %v661 = vpop.f32.mrb[0].mxu0
        %v662 = vadd.f32 %v518, %v661
        %v663 = vpop.f32.mrb[0].mxu0
        %664 = vmatprep.mubr.bf16.mxu0 0
        %665 = vmatmul.mubr.bf16.gmra.mrb[0].mxu0 %v554
        %v666 = vpop.f32.mrb[0].mxu0
        %v667 = vadd.f32 %v518, %v666
        %v668 = vpop.f32.mrb[0].mxu0
        %v669 = vpop.f32.mrb[0].mxu0
        %v670 = vadd.f32 %v518, %v669
        %v671 = vpop.f32.mrb[0].mxu0
        %672 = vmatprep.mubr.bf16.mxu0 0
        %673 = vmatmul.mubr.bf16.gmra.mrb[0].mxu0 %v555
        %v674 = vpop.f32.mrb[0].mxu0
        %v675 = vadd.f32 %v518, %v674
        %v676 = vpop.f32.mrb[0].mxu0
        %v677 = vpop.f32.mrb[0].mxu0
        %v678 = vadd.f32 %v518, %v677
        %v679 = vpop.f32.mrb[0].mxu0
        %680 = vmatprep.mubr.bf16.mxu0 0
        %681 = vmatmul.mubr.bf16.gmra.mrb[0].mxu0 %v556
        %v682 = vpop.f32.mrb[0].mxu0
        %v683 = vadd.f32 %v518, %v682
        %v684 = vpop.f32.mrb[0].mxu0
        %v685 = vpop.f32.mrb[0].mxu0
        %v686 = vadd.f32 %v518, %v685
        %v687 = vpop.f32.mrb[0].mxu0
        %688 = vmatprep.mubr.bf16.mxu0 0
        %689 = vmatmul.mubr.bf16.gmra.mrb[0].mxu0 %v557
        %v690 = vpop.f32.mrb[0].mxu0
        %v691 = vadd.f32 %v518, %v690
        %v692 = vpop.f32.mrb[0].mxu0
        %v693 = vpop.f32.mrb[0].mxu0
        %v694 = vadd.f32 %v518, %v693
        %v695 = vpop.f32.mrb[0].mxu0
        %696 = vmatprep.mubr.bf16.mxu0 0
        %697 = vmatmul.mubr.bf16.gmra.mrb[0].mxu0 %v558
        %v698 = vpop.f32.mrb[0].mxu0
        %v699 = vadd.f32 %v518, %v698
        %v700 = vpop.f32.mrb[0].mxu0
        %v701 = vpop.f32.mrb[0].mxu0
        %v702 = vadd.f32 %v518, %v701
        %v703 = vpop.f32.mrb[0].mxu0
        %704 = vmatprep.mubr.bf16.mxu0 0
        %705 = vmatmul.mubr.bf16.gmra.mrb[0].mxu0 %v559
        %v706 = vpop.f32.mrb[0].mxu0
        %v707 = vadd.f32 %v518, %v706
        %v708 = vpop.f32.mrb[0].mxu0
        %v709 = vpop.f32.mrb[0].mxu0
        %v710 = vadd.f32 %v518, %v709
        %v711 = vpop.f32.mrb[0].mxu0
        %712 = vdwg.mxu0
        %v713 = vmax.f32 %v651, 0.0
        %v714 = vmax.f32 %v654, 0.0
        %v715 = vmax.f32 %v659, 0.0
        %v716 = vmax.f32 %v662, 0.0
        %v717 = vmax.f32 %v667, 0.0
        %v718 = vmax.f32 %v670, 0.0
        %v719 = vmax.f32 %v675, 0.0
        %v720 = vmax.f32 %v678, 0.0
        %v721 = vmax.f32 %v683, 0.0
        %v722 = vmax.f32 %v686, 0.0
        %v723 = vmax.f32 %v691, 0.0
        %v724 = vmax.f32 %v694, 0.0
        %v725 = vmax.f32 %v699, 0.0
        %v726 = vmax.f32 %v702, 0.0
        %v727 = vmax.f32 %v707, 0.0
        %v728 = vmax.f32 %v710, 0.0
        %v729 = vpack.c.bf16 %v714, %v713
        %v730 = vpack.c.bf16 %v716, %v715
        %v731 = vpack.c.bf16 %v718, %v717
        %v732 = vpack.c.bf16 %v720, %v719
        %v733 = vpack.c.bf16 %v722, %v721
        %v734 = vpack.c.bf16 %v724, %v723
        %v735 = vpack.c.bf16 %v726, %v725
        %v736 = vpack.c.bf16 %v728, %v727
        %v737 = vld [vmem:[#allocation7] sm:$0xf]
        %v738 = vld [vmem:[#allocation7 + $0x4] sm:$0xf]
        %v739 = vld [vmem:[#allocation7 + $0x8] sm:$0xf]
        %v740 = vld [vmem:[#allocation7 + $0xc] sm:$0xf]
        %v741 = vld [vmem:[#allocation7 + $0x10] sm:$0xf]
        %v742 = vld [vmem:[#allocation7 + $0x14] sm:$0xf]
        %v743 = vld [vmem:[#allocation7 + $0x18] sm:$0xf]
        %v744 = vld [vmem:[#allocation7 + $0x1c] sm:$0xf]
        %v745 = vld [vmem:[#allocation7 + $0x20] sm:$0xf]
        %v746 = vld [vmem:[#allocation7 + $0x24] sm:$0xf]
        %v747 = vld [vmem:[#allocation7 + $0x28] sm:$0xf]
        %v748 = vld [vmem:[#allocation7 + $0x2c] sm:$0xf]
        %v749 = vld [vmem:[#allocation7 + $0x30] sm:$0xf]
        %v750 = vld [vmem:[#allocation7 + $0x34] sm:$0xf]
        %v751 = vld [vmem:[#allocation7 + $0x38] sm:$0xf]
        %v752 = vld [vmem:[#allocation7 + $0x3c] sm:$0xf]
        %v753 = vld [vmem:[%s4] sm:$0x1]
        %v755 = vlaneseq
        %v756 = vshrl.u32 %v755, 7
        %v757 = vsub.s32 0, %v756
        %v758 = vrot.slane %v753, %v757
        %v776 = vunpack.c.l.b16 %v737
        %v777 = vunpack.c.l.b16 %v738
        %v778 = vunpack.c.l.b16 %v739
        %v779 = vunpack.c.l.b16 %v740
        %v780 = vunpack.c.l.b16 %v741
        %v781 = vunpack.c.l.b16 %v742
        %v782 = vunpack.c.l.b16 %v743
        %v783 = vunpack.c.l.b16 %v744
        %v784 = vunpack.c.l.b16 %v745
        %v785 = vunpack.c.l.b16 %v746
        %v786 = vunpack.c.l.b16 %v747
        %v787 = vunpack.c.l.b16 %v748
        %v788 = vunpack.c.l.b16 %v749
        %v789 = vunpack.c.l.b16 %v750
        %v790 = vunpack.c.l.b16 %v751
        %v791 = vunpack.c.l.b16 %v752
        %v792 = vpack.c.b16 %v777, %v776
        %v793 = vpack.c.b16 %v779, %v778
        %v794 = vpack.c.b16 %v781, %v780
        %v795 = vpack.c.b16 %v783, %v782
        %v796 = vpack.c.b16 %v785, %v784
        %v797 = vpack.c.b16 %v787, %v786
        %v798 = vpack.c.b16 %v789, %v788
        %v799 = vpack.c.b16 %v791, %v790
        %808 = vmatprep.subr.bf16.mxu0 0
        %809 = vmatpush1.bf16.msra.mxu0 %v792
        %810 = vmatprep.subr.bf16.mxu0 0
        %811 = vmatpush1.bf16.msra.mxu0 %v793
        %812 = vmatprep.subr.bf16.mxu0 0
        %813 = vmatpush1.bf16.msra.mxu0 %v794
        %814 = vmatprep.subr.bf16.mxu0 0
        %815 = vmatpush1.bf16.msra.mxu0 %v795
        %816 = vmatprep.subr.bf16.mxu0 0
        %817 = vmatpush1.bf16.msra.mxu0 %v796
        %818 = vmatprep.subr.bf16.mxu0 0
        %819 = vmatpush1.bf16.msra.mxu0 %v797
        %820 = vmatprep.subr.bf16.mxu0 0
        %821 = vmatpush1.bf16.msra.mxu0 %v798
        %822 = vmatprep.subr.bf16.mxu0 0
        %823 = vmatpush1.bf16.msra.mxu0 %v799
        %824 = vmatprep.subr.bf16.mxu0 0
        %825 = vmatpush1.bf16.msra.mxu0 0
        %826 = vmatprep.subr.bf16.mxu0 0
        %827 = vmatpush1.bf16.msra.mxu0 0
        %828 = vmatprep.subr.bf16.mxu0 0
        %829 = vmatpush1.bf16.msra.mxu0 0
        %830 = vmatprep.subr.bf16.mxu0 0
        %831 = vmatpush1.bf16.msra.mxu0 0
        %832 = vmatprep.subr.bf16.mxu0 0
        %833 = vmatpush1.bf16.msra.mxu0 0
        %834 = vmatprep.subr.bf16.mxu0 0
        %835 = vmatpush1.bf16.msra.mxu0 0
        %836 = vmatprep.subr.bf16.mxu0 0
        %837 = vmatpush1.bf16.msra.mxu0 0
        %838 = vmatprep.subr.bf16.mxu0 0
        %839 = vmatpush1.bf16.msra.mxu0 0
        %840 = vmatprep.mubr.bf16.mxu0 0
        %841 = vmatmul.mubr.bf16.gmra.mrb[0].mxu0 %v729
        %v842 = vpop.f32.mrb[0].mxu0
        %v843 = vadd.f32 %v758, %v842
        %v844 = vpop.f32.mrb[0].mxu0
        %v845 = vpop.f32.mrb[0].mxu0
        %v846 = vadd.f32 %v758, %v845
        %v847 = vpop.f32.mrb[0].mxu0
        %848 = vmatprep.mubr.bf16.mxu0 0
        %849 = vmatmul.mubr.bf16.gmra.mrb[0].mxu0 %v730
        %v850 = vpop.f32.mrb[0].mxu0
        %v851 = vadd.f32 %v758, %v850
        %v852 = vpop.f32.mrb[0].mxu0
        %v853 = vpop.f32.mrb[0].mxu0
        %v854 = vadd.f32 %v758, %v853
        %v855 = vpop.f32.mrb[0].mxu0
        %856 = vmatprep.mubr.bf16.mxu0 0
        %857 = vmatmul.mubr.bf16.gmra.mrb[0].mxu0 %v731
        %v858 = vpop.f32.mrb[0].mxu0
        %v859 = vadd.f32 %v758, %v858
        %v860 = vpop.f32.mrb[0].mxu0
        %v861 = vpop.f32.mrb[0].mxu0
        %v862 = vadd.f32 %v758, %v861
        %v863 = vpop.f32.mrb[0].mxu0
        %864 = vmatprep.mubr.bf16.mxu0 0
        %865 = vmatmul.mubr.bf16.gmra.mrb[0].mxu0 %v732
        %v866 = vpop.f32.mrb[0].mxu0
        %v867 = vadd.f32 %v758, %v866
        %v868 = vpop.f32.mrb[0].mxu0
        %v869 = vpop.f32.mrb[0].mxu0
        %v870 = vadd.f32 %v758, %v869
        %v871 = vpop.f32.mrb[0].mxu0
        %872 = vmatprep.mubr.bf16.mxu0 0
        %873 = vmatmul.mubr.bf16.gmra.mrb[0].mxu0 %v733
        %v874 = vpop.f32.mrb[0].mxu0
        %v875 = vadd.f32 %v758, %v874
        %v876 = vpop.f32.mrb[0].mxu0
        %v877 = vpop.f32.mrb[0].mxu0
        %v878 = vadd.f32 %v758, %v877
        %v879 = vpop.f32.mrb[0].mxu0
        %880 = vmatprep.mubr.bf16.mxu0 0
        %881 = vmatmul.mubr.bf16.gmra.mrb[0].mxu0 %v734
        %v882 = vpop.f32.mrb[0].mxu0
        %v883 = vadd.f32 %v758, %v882
        %v884 = vpop.f32.mrb[0].mxu0
        %v885 = vpop.f32.mrb[0].mxu0
        %v886 = vadd.f32 %v758, %v885
        %v887 = vpop.f32.mrb[0].mxu0
        %888 = vmatprep.mubr.bf16.mxu0 0
        %889 = vmatmul.mubr.bf16.gmra.mrb[0].mxu0 %v735
        %v890 = vpop.f32.mrb[0].mxu0
        %v891 = vadd.f32 %v758, %v890
        %v892 = vpop.f32.mrb[0].mxu0
        %v893 = vpop.f32.mrb[0].mxu0
        %v894 = vadd.f32 %v758, %v893
        %v895 = vpop.f32.mrb[0].mxu0
        %896 = vmatprep.mubr.bf16.mxu0 0
        %897 = vmatmul.mubr.bf16.gmra.mrb[0].mxu0 %v736
        %v898 = vpop.f32.mrb[0].mxu0
        %v899 = vadd.f32 %v758, %v898
        %v900 = vpop.f32.mrb[0].mxu0
        %v901 = vpop.f32.mrb[0].mxu0
        %v902 = vadd.f32 %v758, %v901
        %v903 = vpop.f32.mrb[0].mxu0
        %904 = vdwg.mxu0
        %v905 = vmax.f32 %v843, 0.0
        %v906 = vmax.f32 %v846, 0.0
        %v907 = vmax.f32 %v851, 0.0
        %v908 = vmax.f32 %v854, 0.0
        %v909 = vmax.f32 %v859, 0.0
        %v910 = vmax.f32 %v862, 0.0
        %v911 = vmax.f32 %v867, 0.0
        %v912 = vmax.f32 %v870, 0.0
        %v913 = vmax.f32 %v875, 0.0
        %v914 = vmax.f32 %v878, 0.0
        %v915 = vmax.f32 %v883, 0.0
        %v916 = vmax.f32 %v886, 0.0
        %v917 = vmax.f32 %v891, 0.0
        %v918 = vmax.f32 %v894, 0.0
        %v919 = vmax.f32 %v899, 0.0
        %v920 = vmax.f32 %v902, 0.0
        %v921 = vpack.c.bf16 %v906, %v905
        %v922 = vpack.c.bf16 %v908, %v907
        %v923 = vpack.c.bf16 %v910, %v909
        %v924 = vpack.c.bf16 %v912, %v911
        %v925 = vpack.c.bf16 %v914, %v913
        %v926 = vpack.c.bf16 %v916, %v915
        %v927 = vpack.c.bf16 %v918, %v917
        %v928 = vpack.c.bf16 %v920, %v919
        %v929 = vld [vmem:[#allocation8] sm:$0xf]
        %v930 = vld [vmem:[#allocation8 + $0x4] sm:$0xf]
        %v931 = vld [vmem:[#allocation8 + $0x8] sm:$0xf]
        %v932 = vld [vmem:[#allocation8 + $0xc] sm:$0xf]
        %v933 = vld [vmem:[#allocation8 + $0x10] sm:$0xf]
        %v934 = vld [vmem:[#allocation8 + $0x14] sm:$0xf]
        %v935 = vld [vmem:[#allocation8 + $0x18] sm:$0xf]
        %v936 = vld [vmem:[#allocation8 + $0x1c] sm:$0xf]
        %v937 = vld [vmem:[#allocation8 + $0x20] sm:$0xf]
        %v938 = vld [vmem:[#allocation8 + $0x24] sm:$0xf]
        %v939 = vld [vmem:[#allocation8 + $0x28] sm:$0xf]
        %v940 = vld [vmem:[#allocation8 + $0x2c] sm:$0xf]
        %v941 = vld [vmem:[#allocation8 + $0x30] sm:$0xf]
        %v942 = vld [vmem:[#allocation8 + $0x34] sm:$0xf]
        %v943 = vld [vmem:[#allocation8 + $0x38] sm:$0xf]
        %v944 = vld [vmem:[#allocation8 + $0x3c] sm:$0xf]
        %v945 = vld [vmem:[%s6] sm:$0x1]
        %v947 = vlaneseq
        %v948 = vshrl.u32 %v947, 7
        %v949 = vsub.s32 0, %v948
        %v950 = vrot.slane %v945, %v949
        %v968 = vunpack.c.l.b16 %v929
        %v969 = vunpack.c.l.b16 %v930
        %v970 = vunpack.c.l.b16 %v931
        %v971 = vunpack.c.l.b16 %v932
        %v972 = vunpack.c.l.b16 %v933
        %v973 = vunpack.c.l.b16 %v934
        %v974 = vunpack.c.l.b16 %v935
        %v975 = vunpack.c.l.b16 %v936
        %v976 = vunpack.c.l.b16 %v937
        %v977 = vunpack.c.l.b16 %v938
        %v978 = vunpack.c.l.b16 %v939
        %v979 = vunpack.c.l.b16 %v940
        %v980 = vunpack.c.l.b16 %v941
        %v981 = vunpack.c.l.b16 %v942
        %v982 = vunpack.c.l.b16 %v943
        %v983 = vunpack.c.l.b16 %v944
        %v984 = vpack.c.b16 %v969, %v968
        %v985 = vpack.c.b16 %v971, %v970
        %v986 = vpack.c.b16 %v973, %v972
        %v987 = vpack.c.b16 %v975, %v974
        %v988 = vpack.c.b16 %v977, %v976
        %v989 = vpack.c.b16 %v979, %v978
        %v990 = vpack.c.b16 %v981, %v980
        %v991 = vpack.c.b16 %v983, %v982
        %1000 = vmatprep.subr.bf16.mxu0 0
        %1001 = vmatpush1.bf16.msra.mxu0 %v984
        %1002 = vmatprep.subr.bf16.mxu0 0
        %1003 = vmatpush1.bf16.msra.mxu0 %v985
        %1004 = vmatprep.subr.bf16.mxu0 0
        %1005 = vmatpush1.bf16.msra.mxu0 %v986
        %1006 = vmatprep.subr.bf16.mxu0 0
        %1007 = vmatpush1.bf16.msra.mxu0 %v987
        %1008 = vmatprep.subr.bf16.mxu0 0
        %1009 = vmatpush1.bf16.msra.mxu0 %v988
        %1010 = vmatprep.subr.bf16.mxu0 0
        %1011 = vmatpush1.bf16.msra.mxu0 %v989
        %1012 = vmatprep.subr.bf16.mxu0 0
        %1013 = vmatpush1.bf16.msra.mxu0 %v990
        %1014 = vmatprep.subr.bf16.mxu0 0
        %1015 = vmatpush1.bf16.msra.mxu0 %v991
        %1016 = vmatprep.subr.bf16.mxu0 0
        %1017 = vmatpush1.bf16.msra.mxu0 0
        %1018 = vmatprep.subr.bf16.mxu0 0
        %1019 = vmatpush1.bf16.msra.mxu0 0
        %1020 = vmatprep.subr.bf16.mxu0 0
        %1021 = vmatpush1.bf16.msra.mxu0 0
        %1022 = vmatprep.subr.bf16.mxu0 0
        %1023 = vmatpush1.bf16.msra.mxu0 0
        %1024 = vmatprep.subr.bf16.mxu0 0
        %1025 = vmatpush1.bf16.msra.mxu0 0
        %1026 = vmatprep.subr.bf16.mxu0 0
        %1027 = vmatpush1.bf16.msra.mxu0 0
        %1028 = vmatprep.subr.bf16.mxu0 0
        %1029 = vmatpush1.bf16.msra.mxu0 0
        %1030 = vmatprep.subr.bf16.mxu0 0
        %1031 = vmatpush1.bf16.msra.mxu0 0
        %1032 = vmatprep.mubr.bf16.mxu0 0
        %1033 = vmatmul.mubr.bf16.gmra.mrb[0].mxu0 %v921
        %v1034 = vpop.f32.mrb[0].mxu0
        %v1035 = vadd.f32 %v950, %v1034
        %v1036 = vpop.f32.mrb[0].mxu0
        %v1037 = vpop.f32.mrb[0].mxu0
        %v1038 = vadd.f32 %v950, %v1037
        %v1039 = vpop.f32.mrb[0].mxu0
        %1040 = vmatprep.mubr.bf16.mxu0 0
        %1041 = vmatmul.mubr.bf16.gmra.mrb[0].mxu0 %v922
        %v1042 = vpop.f32.mrb[0].mxu0
        %v1043 = vadd.f32 %v950, %v1042
        %v1044 = vpop.f32.mrb[0].mxu0
        %v1045 = vpop.f32.mrb[0].mxu0
        %v1046 = vadd.f32 %v950, %v1045
        %v1047 = vpop.f32.mrb[0].mxu0
        %1048 = vmatprep.mubr.bf16.mxu0 0
        %1049 = vmatmul.mubr.bf16.gmra.mrb[0].mxu0 %v923
        %v1050 = vpop.f32.mrb[0].mxu0
        %v1051 = vadd.f32 %v950, %v1050
        %v1052 = vpop.f32.mrb[0].mxu0
        %v1053 = vpop.f32.mrb[0].mxu0
        %v1054 = vadd.f32 %v950, %v1053
        %v1055 = vpop.f32.mrb[0].mxu0
        %1056 = vmatprep.mubr.bf16.mxu0 0
        %1057 = vmatmul.mubr.bf16.gmra.mrb[0].mxu0 %v924
        %v1058 = vpop.f32.mrb[0].mxu0
        %v1059 = vadd.f32 %v950, %v1058
        %v1060 = vpop.f32.mrb[0].mxu0
        %v1061 = vpop.f32.mrb[0].mxu0
        %v1062 = vadd.f32 %v950, %v1061
        %v1063 = vpop.f32.mrb[0].mxu0
        %1064 = vmatprep.mubr.bf16.mxu0 0
        %1065 = vmatmul.mubr.bf16.gmra.mrb[0].mxu0 %v925
        %v1066 = vpop.f32.mrb[0].mxu0
        %v1067 = vadd.f32 %v950, %v1066
        %v1068 = vpop.f32.mrb[0].mxu0
        %v1069 = vpop.f32.mrb[0].mxu0
        %v1070 = vadd.f32 %v950, %v1069
        %v1071 = vpop.f32.mrb[0].mxu0
        %1072 = vmatprep.mubr.bf16.mxu0 0
        %1073 = vmatmul.mubr.bf16.gmra.mrb[0].mxu0 %v926
        %v1074 = vpop.f32.mrb[0].mxu0
        %v1075 = vadd.f32 %v950, %v1074
        %v1076 = vpop.f32.mrb[0].mxu0
        %v1077 = vpop.f32.mrb[0].mxu0
        %v1078 = vadd.f32 %v950, %v1077
        %v1079 = vpop.f32.mrb[0].mxu0
        %1080 = vmatprep.mubr.bf16.mxu0 0
        %1081 = vmatmul.mubr.bf16.gmra.mrb[0].mxu0 %v927
        %v1082 = vpop.f32.mrb[0].mxu0
        %v1083 = vadd.f32 %v950, %v1082
        %v1084 = vpop.f32.mrb[0].mxu0
        %v1085 = vpop.f32.mrb[0].mxu0
        %v1086 = vadd.f32 %v950, %v1085
        %v1087 = vpop.f32.mrb[0].mxu0
        %1088 = vmatprep.mubr.bf16.mxu0 0
        %1089 = vmatmul.mubr.bf16.gmra.mrb[0].mxu0 %v928
        %v1090 = vpop.f32.mrb[0].mxu0
        %v1091 = vadd.f32 %v950, %v1090
        %v1092 = vpop.f32.mrb[0].mxu0
        %v1093 = vpop.f32.mrb[0].mxu0
        %v1094 = vadd.f32 %v950, %v1093
        %v1095 = vpop.f32.mrb[0].mxu0
        %1096 = vdwg.mxu0
        %v1097 = vmax.f32 %v1035, 0.0
        %v1098 = vmax.f32 %v1038, 0.0
        %v1099 = vmax.f32 %v1043, 0.0
        %v1100 = vmax.f32 %v1046, 0.0
        %v1101 = vmax.f32 %v1051, 0.0
        %v1102 = vmax.f32 %v1054, 0.0
        %v1103 = vmax.f32 %v1059, 0.0
        %v1104 = vmax.f32 %v1062, 0.0
        %v1105 = vmax.f32 %v1067, 0.0
        %v1106 = vmax.f32 %v1070, 0.0
        %v1107 = vmax.f32 %v1075, 0.0
        %v1108 = vmax.f32 %v1078, 0.0
        %v1109 = vmax.f32 %v1083, 0.0
        %v1110 = vmax.f32 %v1086, 0.0
        %v1111 = vmax.f32 %v1091, 0.0
        %v1112 = vmax.f32 %v1094, 0.0
        %v1113 = vpack.c.bf16 %v1098, %v1097
        %v1114 = vpack.c.bf16 %v1100, %v1099
        %v1115 = vpack.c.bf16 %v1102, %v1101
        %v1116 = vpack.c.bf16 %v1104, %v1103
        %v1117 = vpack.c.bf16 %v1106, %v1105
        %v1118 = vpack.c.bf16 %v1108, %v1107
        %v1119 = vpack.c.bf16 %v1110, %v1109
        %v1120 = vpack.c.bf16 %v1112, %v1111
        %v1121 = vld [vmem:[#allocation10] sm:$0xf]
        %v1122 = vld [vmem:[#allocation10 + $0x4] sm:$0xf]
        %v1123 = vld [vmem:[#allocation10 + $0x8] sm:$0xf]
        %v1124 = vld [vmem:[#allocation10 + $0xc] sm:$0xf]
        %v1125 = vld [vmem:[#allocation10 + $0x10] sm:$0xf]
        %v1126 = vld [vmem:[#allocation10 + $0x14] sm:$0xf]
        %v1127 = vld [vmem:[#allocation10 + $0x18] sm:$0xf]
        %v1128 = vld [vmem:[#allocation10 + $0x1c] sm:$0xf]
        %v1129 = vld [vmem:[#allocation10 + $0x20] sm:$0xf]
        %v1130 = vld [vmem:[#allocation10 + $0x24] sm:$0xf]
        %v1131 = vld [vmem:[#allocation10 + $0x28] sm:$0xf]
        %v1132 = vld [vmem:[#allocation10 + $0x2c] sm:$0xf]
        %v1133 = vld [vmem:[#allocation10 + $0x30] sm:$0xf]
        %v1134 = vld [vmem:[#allocation10 + $0x34] sm:$0xf]
        %v1135 = vld [vmem:[#allocation10 + $0x38] sm:$0xf]
        %v1136 = vld [vmem:[#allocation10 + $0x3c] sm:$0xf]
        %v1137 = vld [vmem:[%s8] sm:$0x1]
        %v1139 = vlaneseq
        %v1140 = vshrl.u32 %v1139, 7
        %v1141 = vsub.s32 0, %v1140
        %v1142 = vrot.slane %v1137, %v1141
        %v1160 = vunpack.c.l.b16 %v1121
        %v1161 = vunpack.c.l.b16 %v1122
        %v1162 = vunpack.c.l.b16 %v1123
        %v1163 = vunpack.c.l.b16 %v1124
        %v1164 = vunpack.c.l.b16 %v1125
        %v1165 = vunpack.c.l.b16 %v1126
        %v1166 = vunpack.c.l.b16 %v1127
        %v1167 = vunpack.c.l.b16 %v1128
        %v1168 = vunpack.c.l.b16 %v1129
        %v1169 = vunpack.c.l.b16 %v1130
        %v1170 = vunpack.c.l.b16 %v1131
        %v1171 = vunpack.c.l.b16 %v1132
        %v1172 = vunpack.c.l.b16 %v1133
        %v1173 = vunpack.c.l.b16 %v1134
        %v1174 = vunpack.c.l.b16 %v1135
        %v1175 = vunpack.c.l.b16 %v1136
        %v1176 = vpack.c.b16 %v1161, %v1160
        %v1177 = vpack.c.b16 %v1163, %v1162
        %v1178 = vpack.c.b16 %v1165, %v1164
        %v1179 = vpack.c.b16 %v1167, %v1166
        %v1180 = vpack.c.b16 %v1169, %v1168
        %v1181 = vpack.c.b16 %v1171, %v1170
        %v1182 = vpack.c.b16 %v1173, %v1172
        %v1183 = vpack.c.b16 %v1175, %v1174
        %1192 = vmatprep.subr.bf16.mxu0 0
        %1193 = vmatpush1.bf16.msra.mxu0 %v1176
        %1194 = vmatprep.subr.bf16.mxu0 0
        %1195 = vmatpush1.bf16.msra.mxu0 %v1177
        %1196 = vmatprep.subr.bf16.mxu0 0
        %1197 = vmatpush1.bf16.msra.mxu0 %v1178
        %1198 = vmatprep.subr.bf16.mxu0 0
        %1199 = vmatpush1.bf16.msra.mxu0 %v1179
        %1200 = vmatprep.subr.bf16.mxu0 0
        %1201 = vmatpush1.bf16.msra.mxu0 %v1180
        %1202 = vmatprep.subr.bf16.mxu0 0
        %1203 = vmatpush1.bf16.msra.mxu0 %v1181
        %1204 = vmatprep.subr.bf16.mxu0 0
        %1205 = vmatpush1.bf16.msra.mxu0 %v1182
        %1206 = vmatprep.subr.bf16.mxu0 0
        %1207 = vmatpush1.bf16.msra.mxu0 %v1183
        %1208 = vmatprep.subr.bf16.mxu0 0
        %1209 = vmatpush1.bf16.msra.mxu0 0
        %1210 = vmatprep.subr.bf16.mxu0 0
        %1211 = vmatpush1.bf16.msra.mxu0 0
        %1212 = vmatprep.subr.bf16.mxu0 0
        %1213 = vmatpush1.bf16.msra.mxu0 0
        %1214 = vmatprep.subr.bf16.mxu0 0
        %1215 = vmatpush1.bf16.msra.mxu0 0
        %1216 = vmatprep.subr.bf16.mxu0 0
        %1217 = vmatpush1.bf16.msra.mxu0 0
        %1218 = vmatprep.subr.bf16.mxu0 0
        %1219 = vmatpush1.bf16.msra.mxu0 0
        %1220 = vmatprep.subr.bf16.mxu0 0
        %1221 = vmatpush1.bf16.msra.mxu0 0
        %1222 = vmatprep.subr.bf16.mxu0 0
        %1223 = vmatpush1.bf16.msra.mxu0 0
        %1224 = vmatprep.mubr.bf16.mxu0 0
        %1225 = vmatmul.mubr.bf16.gmra.mrb[0].mxu0 %v1113
        %v1226 = vpop.f32.mrb[0].mxu0
        %v1227 = vadd.f32 %v1142, %v1226
        %v1228 = vpop.f32.mrb[0].mxu0
        %v1229 = vpop.f32.mrb[0].mxu0
        %v1230 = vadd.f32 %v1142, %v1229
        %v1231 = vpop.f32.mrb[0].mxu0
        %1232 = vmatprep.mubr.bf16.mxu0 0
        %1233 = vmatmul.mubr.bf16.gmra.mrb[0].mxu0 %v1114
        %v1234 = vpop.f32.mrb[0].mxu0
        %v1235 = vadd.f32 %v1142, %v1234
        %v1236 = vpop.f32.mrb[0].mxu0
        %v1237 = vpop.f32.mrb[0].mxu0
        %v1238 = vadd.f32 %v1142, %v1237
        %v1239 = vpop.f32.mrb[0].mxu0
        %1240 = vmatprep.mubr.bf16.mxu0 0
        %1241 = vmatmul.mubr.bf16.gmra.mrb[0].mxu0 %v1115
        %v1242 = vpop.f32.mrb[0].mxu0
        %v1243 = vadd.f32 %v1142, %v1242
        %v1244 = vpop.f32.mrb[0].mxu0
        %v1245 = vpop.f32.mrb[0].mxu0
        %v1246 = vadd.f32 %v1142, %v1245
        %v1247 = vpop.f32.mrb[0].mxu0
        %1248 = vmatprep.mubr.bf16.mxu0 0
        %1249 = vmatmul.mubr.bf16.gmra.mrb[0].mxu0 %v1116
        %v1250 = vpop.f32.mrb[0].mxu0
        %v1251 = vadd.f32 %v1142, %v1250
        %v1252 = vpop.f32.mrb[0].mxu0
        %v1253 = vpop.f32.mrb[0].mxu0
        %v1254 = vadd.f32 %v1142, %v1253
        %v1255 = vpop.f32.mrb[0].mxu0
        %1256 = vmatprep.mubr.bf16.mxu0 0
        %1257 = vmatmul.mubr.bf16.gmra.mrb[0].mxu0 %v1117
        %v1258 = vpop.f32.mrb[0].mxu0
        %v1259 = vadd.f32 %v1142, %v1258
        %v1260 = vpop.f32.mrb[0].mxu0
        %v1261 = vpop.f32.mrb[0].mxu0
        %v1262 = vadd.f32 %v1142, %v1261
        %v1263 = vpop.f32.mrb[0].mxu0
        %1264 = vmatprep.mubr.bf16.mxu0 0
        %1265 = vmatmul.mubr.bf16.gmra.mrb[0].mxu0 %v1118
        %v1266 = vpop.f32.mrb[0].mxu0
        %v1267 = vadd.f32 %v1142, %v1266
        %v1268 = vpop.f32.mrb[0].mxu0
        %v1269 = vpop.f32.mrb[0].mxu0
        %v1270 = vadd.f32 %v1142, %v1269
        %v1271 = vpop.f32.mrb[0].mxu0
        %1272 = vmatprep.mubr.bf16.mxu0 0
        %1273 = vmatmul.mubr.bf16.gmra.mrb[0].mxu0 %v1119
        %v1274 = vpop.f32.mrb[0].mxu0
        %v1275 = vadd.f32 %v1142, %v1274
        %v1276 = vpop.f32.mrb[0].mxu0
        %v1277 = vpop.f32.mrb[0].mxu0
        %v1278 = vadd.f32 %v1142, %v1277
        %v1279 = vpop.f32.mrb[0].mxu0
        %1280 = vmatprep.mubr.bf16.mxu0 0
        %1281 = vmatmul.mubr.bf16.gmra.mrb[0].mxu0 %v1120
        %v1282 = vpop.f32.mrb[0].mxu0
        %v1283 = vadd.f32 %v1142, %v1282
        %v1284 = vpop.f32.mrb[0].mxu0
        %v1285 = vpop.f32.mrb[0].mxu0
        %v1286 = vadd.f32 %v1142, %v1285
        %v1287 = vpop.f32.mrb[0].mxu0
        %1288 = vdwg.mxu0
        %v1289 = vmax.f32 %v1227, 0.0
        %v1290 = vmax.f32 %v1230, 0.0
        %v1291 = vmax.f32 %v1235, 0.0
        %v1292 = vmax.f32 %v1238, 0.0
        %v1293 = vmax.f32 %v1243, 0.0
        %v1294 = vmax.f32 %v1246, 0.0
        %v1295 = vmax.f32 %v1251, 0.0
        %v1296 = vmax.f32 %v1254, 0.0
        %v1297 = vmax.f32 %v1259, 0.0
        %v1298 = vmax.f32 %v1262, 0.0
        %v1299 = vmax.f32 %v1267, 0.0
        %v1300 = vmax.f32 %v1270, 0.0
        %v1301 = vmax.f32 %v1275, 0.0
        %v1302 = vmax.f32 %v1278, 0.0
        %v1303 = vmax.f32 %v1283, 0.0
        %v1304 = vmax.f32 %v1286, 0.0
        %v1305 = vpack.c.bf16 %v1290, %v1289
        %v1306 = vpack.c.bf16 %v1292, %v1291
        %v1307 = vpack.c.bf16 %v1294, %v1293
        %v1308 = vpack.c.bf16 %v1296, %v1295
        %v1309 = vpack.c.bf16 %v1298, %v1297
        %v1310 = vpack.c.bf16 %v1300, %v1299
        %v1311 = vpack.c.bf16 %v1302, %v1301
        %v1312 = vpack.c.bf16 %v1304, %v1303
        %v1313 = vld [vmem:[#allocation11] sm:$0xf]
        %v1314 = vld [vmem:[#allocation11 + $0x4] sm:$0xf]
        %v1315 = vld [vmem:[#allocation11 + $0x8] sm:$0xf]
        %v1316 = vld [vmem:[#allocation11 + $0xc] sm:$0xf]
        %v1317 = vld [vmem:[#allocation11 + $0x10] sm:$0xf]
        %v1318 = vld [vmem:[#allocation11 + $0x14] sm:$0xf]
        %v1319 = vld [vmem:[#allocation11 + $0x18] sm:$0xf]
        %v1320 = vld [vmem:[#allocation11 + $0x1c] sm:$0xf]
        %v1321 = vld [vmem:[#allocation11 + $0x20] sm:$0xf]
        %v1322 = vld [vmem:[#allocation11 + $0x24] sm:$0xf]
        %v1323 = vld [vmem:[#allocation11 + $0x28] sm:$0xf]
        %v1324 = vld [vmem:[#allocation11 + $0x2c] sm:$0xf]
        %v1325 = vld [vmem:[#allocation11 + $0x30] sm:$0xf]
        %v1326 = vld [vmem:[#allocation11 + $0x34] sm:$0xf]
        %v1327 = vld [vmem:[#allocation11 + $0x38] sm:$0xf]
        %v1328 = vld [vmem:[#allocation11 + $0x3c] sm:$0xf]
        %v1329 = vld [vmem:[%s10] sm:$0x1]
        %v1331 = vlaneseq
        %v1332 = vshrl.u32 %v1331, 7
        %v1333 = vsub.s32 0, %v1332
        %v1334 = vrot.slane %v1329, %v1333
        %v1352 = vunpack.c.l.b16 %v1313
        %v1353 = vunpack.c.l.b16 %v1314
        %v1354 = vunpack.c.l.b16 %v1315
        %v1355 = vunpack.c.l.b16 %v1316
        %v1356 = vunpack.c.l.b16 %v1317
        %v1357 = vunpack.c.l.b16 %v1318
        %v1358 = vunpack.c.l.b16 %v1319
        %v1359 = vunpack.c.l.b16 %v1320
        %v1360 = vunpack.c.l.b16 %v1321
        %v1361 = vunpack.c.l.b16 %v1322
        %v1362 = vunpack.c.l.b16 %v1323
        %v1363 = vunpack.c.l.b16 %v1324
        %v1364 = vunpack.c.l.b16 %v1325
        %v1365 = vunpack.c.l.b16 %v1326
        %v1366 = vunpack.c.l.b16 %v1327
        %v1367 = vunpack.c.l.b16 %v1328
        %v1368 = vpack.c.b16 %v1353, %v1352
        %v1369 = vpack.c.b16 %v1355, %v1354
        %v1370 = vpack.c.b16 %v1357, %v1356
        %v1371 = vpack.c.b16 %v1359, %v1358
        %v1372 = vpack.c.b16 %v1361, %v1360
        %v1373 = vpack.c.b16 %v1363, %v1362
        %v1374 = vpack.c.b16 %v1365, %v1364
        %v1375 = vpack.c.b16 %v1367, %v1366
        %1384 = vmatprep.subr.bf16.mxu0 0
        %1385 = vmatpush1.bf16.msra.mxu0 %v1368
        %1386 = vmatprep.subr.bf16.mxu0 0
        %1387 = vmatpush1.bf16.msra.mxu0 %v1369
        %1388 = vmatprep.subr.bf16.mxu0 0
        %1389 = vmatpush1.bf16.msra.mxu0 %v1370
        %1390 = vmatprep.subr.bf16.mxu0 0
        %1391 = vmatpush1.bf16.msra.mxu0 %v1371
        %1392 = vmatprep.subr.bf16.mxu0 0
        %1393 = vmatpush1.bf16.msra.mxu0 %v1372
        %1394 = vmatprep.subr.bf16.mxu0 0
        %1395 = vmatpush1.bf16.msra.mxu0 %v1373
        %1396 = vmatprep.subr.bf16.mxu0 0
        %1397 = vmatpush1.bf16.msra.mxu0 %v1374
        %1398 = vmatprep.subr.bf16.mxu0 0
        %1399 = vmatpush1.bf16.msra.mxu0 %v1375
        %1400 = vmatprep.subr.bf16.mxu0 0
        %1401 = vmatpush1.bf16.msra.mxu0 0
        %1402 = vmatprep.subr.bf16.mxu0 0
        %1403 = vmatpush1.bf16.msra.mxu0 0
        %1404 = vmatprep.subr.bf16.mxu0 0
        %1405 = vmatpush1.bf16.msra.mxu0 0
        %1406 = vmatprep.subr.bf16.mxu0 0
        %1407 = vmatpush1.bf16.msra.mxu0 0
        %1408 = vmatprep.subr.bf16.mxu0 0
        %1409 = vmatpush1.bf16.msra.mxu0 0
        %1410 = vmatprep.subr.bf16.mxu0 0
        %1411 = vmatpush1.bf16.msra.mxu0 0
        %1412 = vmatprep.subr.bf16.mxu0 0
        %1413 = vmatpush1.bf16.msra.mxu0 0
        %1414 = vmatprep.subr.bf16.mxu0 0
        %1415 = vmatpush1.bf16.msra.mxu0 0
        %1416 = vmatprep.mubr.bf16.mxu0 0
        %1417 = vmatmul.mubr.bf16.gmra.mrb[0].mxu0 %v1305
        %v1418 = vpop.f32.mrb[0].mxu0
        %v1419 = vadd.f32 %v1334, %v1418
        %v1420 = vpop.f32.mrb[0].mxu0
        %v1421 = vpop.f32.mrb[0].mxu0
        %v1422 = vadd.f32 %v1334, %v1421
        %v1423 = vpop.f32.mrb[0].mxu0
        %1424 = vmatprep.mubr.bf16.mxu0 0
        %1425 = vmatmul.mubr.bf16.gmra.mrb[0].mxu0 %v1306
        %v1426 = vpop.f32.mrb[0].mxu0
        %v1427 = vadd.f32 %v1334, %v1426
        %v1428 = vpop.f32.mrb[0].mxu0
        %v1429 = vpop.f32.mrb[0].mxu0
        %v1430 = vadd.f32 %v1334, %v1429
        %v1431 = vpop.f32.mrb[0].mxu0
        %1432 = vmatprep.mubr.bf16.mxu0 0
        %1433 = vmatmul.mubr.bf16.gmra.mrb[0].mxu0 %v1307
        %v1434 = vpop.f32.mrb[0].mxu0
        %v1435 = vadd.f32 %v1334, %v1434
        %v1436 = vpop.f32.mrb[0].mxu0
        %v1437 = vpop.f32.mrb[0].mxu0
        %v1438 = vadd.f32 %v1334, %v1437
        %v1439 = vpop.f32.mrb[0].mxu0
        %1440 = vmatprep.mubr.bf16.mxu0 0
        %1441 = vmatmul.mubr.bf16.gmra.mrb[0].mxu0 %v1308
        %v1442 = vpop.f32.mrb[0].mxu0
        %v1443 = vadd.f32 %v1334, %v1442
        %v1444 = vpop.f32.mrb[0].mxu0
        %v1445 = vpop.f32.mrb[0].mxu0
        %v1446 = vadd.f32 %v1334, %v1445
        %v1447 = vpop.f32.mrb[0].mxu0
        %1448 = vmatprep.mubr.bf16.mxu0 0
        %1449 = vmatmul.mubr.bf16.gmra.mrb[0].mxu0 %v1309
        %v1450 = vpop.f32.mrb[0].mxu0
        %v1451 = vadd.f32 %v1334, %v1450
        %v1452 = vpop.f32.mrb[0].mxu0
        %v1453 = vpop.f32.mrb[0].mxu0
        %v1454 = vadd.f32 %v1334, %v1453
        %v1455 = vpop.f32.mrb[0].mxu0
        %1456 = vmatprep.mubr.bf16.mxu0 0
        %1457 = vmatmul.mubr.bf16.gmra.mrb[0].mxu0 %v1310
        %v1458 = vpop.f32.mrb[0].mxu0
        %v1459 = vadd.f32 %v1334, %v1458
        %v1460 = vpop.f32.mrb[0].mxu0
        %v1461 = vpop.f32.mrb[0].mxu0
        %v1462 = vadd.f32 %v1334, %v1461
        %v1463 = vpop.f32.mrb[0].mxu0
        %1464 = vmatprep.mubr.bf16.mxu0 0
        %1465 = vmatmul.mubr.bf16.gmra.mrb[0].mxu0 %v1311
        %v1466 = vpop.f32.mrb[0].mxu0
        %v1467 = vadd.f32 %v1334, %v1466
        %v1468 = vpop.f32.mrb[0].mxu0
        %v1469 = vpop.f32.mrb[0].mxu0
        %v1470 = vadd.f32 %v1334, %v1469
        %v1471 = vpop.f32.mrb[0].mxu0
        %1472 = vmatprep.mubr.bf16.mxu0 0
        %1473 = vmatmul.mubr.bf16.gmra.mrb[0].mxu0 %v1312
        %v1474 = vpop.f32.mrb[0].mxu0
        %v1475 = vadd.f32 %v1334, %v1474
        %v1476 = vpop.f32.mrb[0].mxu0
        %v1477 = vpop.f32.mrb[0].mxu0
        %v1478 = vadd.f32 %v1334, %v1477
        %v1479 = vpop.f32.mrb[0].mxu0
        %1480 = vdwg.mxu0
        %v1481 = vtanh.pop %v1419
        %v1482 = vtanh.pop %v1422
        %v1483 = vtanh.pop %v1427
        %v1484 = vtanh.pop %v1430
        %v1485 = vtanh.pop %v1435
        %v1486 = vtanh.pop %v1438
        %v1487 = vtanh.pop %v1443
        %v1488 = vtanh.pop %v1446
        %v1489 = vtanh.pop %v1451
        %v1490 = vtanh.pop %v1454
        %v1491 = vtanh.pop %v1459
        %v1492 = vtanh.pop %v1462
        %v1493 = vtanh.pop %v1467
        %v1494 = vtanh.pop %v1470
        %v1495 = vtanh.pop %v1475
        %v1496 = vtanh.pop %v1478
        %1497 = vst [vmem:[%s477] sm:$0xff] %v1481
        %1498 = vst [vmem:[%s477 + $0x8] sm:$0xff] %v1482
        %1499 = vst [vmem:[%s477 + $0x10] sm:$0xff] %v1483
        %1500 = vst [vmem:[%s477 + $0x18] sm:$0xff] %v1484
        %1501 = vst [vmem:[%s477 + $0x20] sm:$0xff] %v1485
        %1502 = vst [vmem:[%s477 + $0x28] sm:$0xff] %v1486
        %1503 = vst [vmem:[%s477 + $0x30] sm:$0xff] %v1487
        %1504 = vst [vmem:[%s477 + $0x38] sm:$0xff] %v1488
        %1505 = vst [vmem:[%s477 + $0x40] sm:$0xff] %v1489
        %1506 = vst [vmem:[%s477 + $0x48] sm:$0xff] %v1490
        %1507 = vst [vmem:[%s477 + $0x50] sm:$0xff] %v1491
        %1508 = vst [vmem:[%s477 + $0x58] sm:$0xff] %v1492
        %1509 = vst [vmem:[%s477 + $0x60] sm:$0xff] %v1493
        %1510 = vst [vmem:[%s477 + $0x68] sm:$0xff] %v1494
        %1511 = vst [vmem:[%s477 + $0x70] sm:$0xff] %v1495
        %1512 = vst [vmem:[%s477 + $0x78] sm:$0xff] %v1496
        %s1513 = sand.u32 %s275, 1
        %s1514 = scalar_lea.sflag [#allocation4], %s1513
        %s1515 = sand.u32 %s275, 1
        %s1516 = smul.addr %s1515, 128
        %s1517 = scalar_lea.vmem [#allocation13], %s1516
        // Predicated region
        $region89: #{tpu_custom_call.1} parent=63 // pred_check
          %p1518 = pneg %p285
        $region90: #{tpu_custom_call.1} parent=63 // pred_check_branch
          %1520 = sbr.rel (%p1518) target = $region92
        $region91: #{tpu_custom_call.1} parent=63 // pred_region
          %s1521 = smul.u32 16, %s31
          %s1523 = ssub.s32 2048, 2048
          %1524 = vsyncadd %s1514, %s1523
          %s1525 = smul.addr %s1521, 128
          %s1526 = scalar_lea.hbm %s11, %s1525
          %s1527 = sshll.u32 %s1517, 4
          %s1528 = int_to_ptr.vmem [resolvable:$true] %s1527
          %1533 = dma.vmem_to_hbm [thread:$0]  %s1528, 2048, %s1526, %s1514, 128, 128, 8
        $region92: #{tpu_custom_call.1} parent=63 // pred_fallthru
          _
      $region64: #{tpu_custom_call.1} parent=5 // pred_fallthru
        _
      %p1534 = scmp.le.s32.totalorder 2, %s26
      // Predicated region
      $region93: #{tpu_custom_call.1} parent=5 // pred_check
        %p1535 = pneg %p1534
      $region94: #{tpu_custom_call.1} parent=5 // pred_check_branch
        %1537 = sbr.rel (%p1535) target = $region96
      $region95: #{tpu_custom_call.1} parent=5 // pred_region
        %s1538 = ssub.s32 %s26, 2
        // Predicated region
        $region97: #{tpu_custom_call.1} parent=95 // pred_check
          %p1539 = pneg %p291
        $region98: #{tpu_custom_call.1} parent=95 // pred_check_branch
          %1541 = sbr.rel (%p1539) target = $region100
        $region99: #{tpu_custom_call.1} parent=95 // pred_region
          %s1542 = sand.u32 %s276, 1
          %s1543 = scalar_lea.sflag [#allocation4], %s1542
          %s1544 = sand.u32 %s276, 1
          %s1545 = smul.addr %s1544, 128
          %s1546 = scalar_lea.vmem [#allocation13], %s1545
          %1547 = dma.done %s1543, 2048
        $region100: #{tpu_custom_call.1} parent=95 // pred_fallthru
          _
      $region96: #{tpu_custom_call.1} parent=5 // pred_fallthru
        _
    $region6: #{tpu_custom_call.1} parent=1 // loop_footer
      %s30 = sadd.s32 1, %s26
    $region7: #{tpu_custom_call.1} parent=1 // loop_footer_branch
      %25 = sbr.rel target = $region3
    $region8: #{tpu_custom_call.1} parent=1 // loop_exit
      _
    %1548 = vsyncpa [#allocation3], 1
    %s1549 = scalar_lea.sflag [#allocation3], 1
    %1550 = vsyncpa %s1549, 1
    %1551 = vsyncpa [#allocation6], 1
    %1552 = vsyncpa [#allocation9], 1
    %1553 = vsyncpa [#allocation12], 1
    %1554 = vsyncpa [#allocation4], 1
    %s1555 = scalar_lea.sflag [#allocation4], 1
    %1556 = vsyncpa %s1555, 1

</llo_original>
